<compile_context>
chip_gen: v5e
topology: v5e:2x2
jax: 0.10.0
libtpu: 0.0.40
codegen_flags: <defaults>
</compile_context>

<pallas_src>
import jax
import jax.numpy as jnp
from jax import lax
from jax.experimental import pallas as pl
from jax.experimental.pallas import tpu as pltpu

latent_dim = 64
input_dim = 9
output_dim = 9
encoder_layers = [128, 256]
decoder_layers = [256, 256]

MAX_TILE_B = 2048  # cap; multiple of 256 (v6e/v7x MXU) and 128 (v5e MXU)

# Original (unfused) layer shapes, matching the PyTorch module.
LAYER_DIMS = [
    (input_dim, encoder_layers[0]),          # enc 0: 9   -> 128
    (encoder_layers[0], encoder_layers[1]),  # enc 1: 128 -> 256
    (encoder_layers[1], latent_dim),         # enc 2: 256 -> 64
    (latent_dim, decoder_layers[0]),         # dec 0: 64  -> 256
    (decoder_layers[0], decoder_layers[1]),  # dec 1: 256 -> 256
    (decoder_layers[1], output_dim),         # dec 2: 256 -> 9
]

# Kernel-side (fused) layer shapes: enc-2 + dec-0 collapse into one 256x256.
FUSED_DIMS = [
    (input_dim, encoder_layers[0]),
    (encoder_layers[0], encoder_layers[1]),
    (encoder_layers[1], decoder_layers[0]),  # fused latent pair
    (decoder_layers[0], decoder_layers[1]),
    (decoder_layers[1], output_dim),
]


def autoencoder_kernel(x_ref,
                       w1_ref, b1_ref,
                       w2_ref, b2_ref,
                       w34_ref, b34_ref,
                       w5_ref, b5_ref,
                       w6t_ref, b6t_ref,
                       out_ref):
    h = x_ref[...]

    # Encoder (first two layers) — Linear + ReLU, f32 accumulate.
    h = jnp.maximum(
        jnp.dot(h, w1_ref[...], preferred_element_type=jnp.float32) + b1_ref[...], 0.0)
    h = jnp.maximum(
        jnp.dot(h, w2_ref[...], preferred_element_type=jnp.float32) + b2_ref[...], 0.0)

    # Fused latent pair: relu((x @ W3 + b3) @ W4 + b4) == relu(x @ (W3@W4) + (b3@W4 + b4))
    h = jnp.maximum(
        jnp.dot(h, w34_ref[...], preferred_element_type=jnp.float32) + b34_ref[...], 0.0)

    # Decoder hidden layer.
    h = jnp.maximum(
        jnp.dot(h, w5_ref[...], preferred_element_type=jnp.float32) + b5_ref[...], 0.0)

    # Final layer, computed transposed for lane-dense stores:
    #   out.T[o, m] = sum_k W6_pt[o, k] * h[m, k]   (NT contraction on the 256 dim)
    out_t = lax.dot_general(
        w6t_ref[...], h,
        dimension_numbers=(((1,), (1,)), ((), ())),
        preferred_element_type=jnp.float32)
    out_ref[...] = out_t + b6t_ref[...]


def _choose_tile_b(batch, max_tile=MAX_TILE_B):
    """Batch tile: multiple of 256, <= max_tile, >= 2 grid steps when possible."""
    b256 = ((max(batch, 1) + 255) // 256) * 256
    if b256 <= 256:
        return 256
    tile = min(max_tile, ((b256 // 2) // 256) * 256)  # aim for >= 2 steps (v7x megacore)
    return max(tile, 256)


def prepare_params(params):
    """Convert 6 (W(in,out), b) layers into the 5 fused kernel-layout layers."""
    (w1, b1), (w2, b2), (w3, b3), (w4, b4), (w5, b5), (w6, b6) = params
    w34 = jnp.dot(w3, w4, preferred_element_type=jnp.float32)            # (256, 256)
    b34 = jnp.dot(b3, w4, preferred_element_type=jnp.float32) + b4       # (256,)
    w6t = w6.T                                                           # (9, 256)
    return [
        (w1, b1.reshape(1, -1)),
        (w2, b2.reshape(1, -1)),
        (w34, b34.reshape(1, -1)),
        (w5, b5.reshape(1, -1)),
        (w6t, b6.reshape(-1, 1)),   # (9, 1) bias for the transposed output
    ]


def autoencoder_forward(x, params, *, tile_b=None):
    """x: (B, input_dim) f32. params: 6 layers of (W as (in, out), b)."""
    B = x.shape[0]
    if tile_b is None:
        tile_b = _choose_tile_b(B)
    Bp = pl.cdiv(B, tile_b) * tile_b
    pad_b = Bp - B
    x_p = jnp.pad(x, ((0, pad_b), (0, 0))) if pad_b else x

    kparams = prepare_params(params)

    # Weights/biases: full-array blocks with constant index_map -> DMA'd once,
    # resident in VMEM across all grid steps.
    flat = []
    weight_specs = []
    for (W, b) in kparams:
        flat.append(W)
        flat.append(b)
        weight_specs.append(pl.BlockSpec(W.shape, lambda i: (0, 0)))
        weight_specs.append(pl.BlockSpec(b.shape, lambda i: (0, 0)))

    flops = 2 * Bp * sum(fi * fo for fi, fo in FUSED_DIMS)
    param_bytes = sum(int(W.size + b.size) * 4 for W, b in kparams)
    bytes_accessed = Bp * (input_dim + output_dim) * 4 + param_bytes

    out_t = pl.pallas_call(
        autoencoder_kernel,
        out_shape=jax.ShapeDtypeStruct((output_dim, Bp), jnp.float32),
        grid=(Bp // tile_b,),
        in_specs=[pl.BlockSpec((tile_b, input_dim), lambda i: (i, 0))] + weight_specs,
        out_specs=pl.BlockSpec((output_dim, tile_b), lambda i: (0, i)),
        compiler_params=pltpu.CompilerParams(
            dimension_semantics=("parallel",),   # shard batch tiles across TCs (v7x)
            vmem_limit_bytes=32 * 1024 * 1024,   # safe on v5e/v6e/v7x at tile_b<=2048
        ),
        cost_estimate=pl.CostEstimate(
            flops=flops, transcendentals=0, bytes_accessed=bytes_accessed),
    )(x_p, *flat)

    out = out_t.T                      # (Bp, 9), lane-dense store happened in-kernel
    return out[:B] if pad_b else out


def init_params(key):
    """Deterministic init matching the PyTorch module's layer shapes.

    Weights are returned as (in, out) (i.e. PyTorch W.T) so x @ W + b matches
    torch.nn.Linear's y = x @ W.T + b.
    """
    params = []
    for (fan_in, fan_out) in LAYER_DIMS:
        key, kw, kb = jax.random.split(key, 3)
        bound = 1.0 / jnp.sqrt(fan_in)  # PyTorch Linear default uniform bound
        W = jax.random.uniform(kw, (fan_in, fan_out), jnp.float32, -bound, bound)
        b = jax.random.uniform(kb, (fan_out,), jnp.float32, -bound, bound)
        params.append((W, b))
    return params


def reference_forward(x, params):
    """Pure-JAX reference mirroring the (unfused) PyTorch forward."""
    h = x
    for i, (W, b) in enumerate(params[:3]):    # encoder
        h = h @ W + b
        if i < 2:
            h = jnp.maximum(h, 0.0)
    for i, (W, b) in enumerate(params[3:]):    # decoder
        h = h @ W + b
        if i < 2:
            h = jnp.maximum(h, 0.0)
    return h


if __name__ == "__main__":
    key = jax.random.PRNGKey(0)
    key, kx1, kx2 = jax.random.split(key, 3)
    params = init_params(key)

    # Multi-tile batch that also exercises the padding path (600 -> 768 rows, 3 steps).
    B1 = 600
    x1 = jax.random.normal(kx1, (B1, input_dim), dtype=jnp.float32)
    out1 = jax.block_until_ready(autoencoder_forward(x1, params))
    ref1 = reference_forward(x1, params)
    assert out1.shape == (B1, output_dim)
    assert jnp.allclose(out1, ref1, atol=1e-4, rtol=1e-4), "mismatch vs JAX reference (B=600)"

    # Tiny batch (single padded tile) to match the original toy usage.
    B2 = 7
    x2 = jax.random.normal(kx2, (B2, input_dim), dtype=jnp.float32)
    out2 = jax.block_until_ready(autoencoder_forward(x2, params))
    ref2 = reference_forward(x2, params)
    assert out2.shape == (B2, output_dim)
    assert jnp.allclose(out2, ref2, atol=1e-4, rtol=1e-4), "mismatch vs JAX reference (B=7)"

    print("KERNEL_OK")
</pallas_src>

<mosaic_0001>
module attributes {stable_mosaic.version = 11 : i64} {
  func.func @autoencoder_kernel(%arg0: i32, %arg1: memref<256x9xf32, #tpu.memory_space<vmem>>, %arg2: memref<9x128xf32, #tpu.memory_space<vmem>>, %arg3: memref<1x128xf32, #tpu.memory_space<vmem>>, %arg4: memref<128x256xf32, #tpu.memory_space<vmem>>, %arg5: memref<1x256xf32, #tpu.memory_space<vmem>>, %arg6: memref<256x256xf32, #tpu.memory_space<vmem>>, %arg7: memref<1x256xf32, #tpu.memory_space<vmem>>, %arg8: memref<256x256xf32, #tpu.memory_space<vmem>>, %arg9: memref<1x256xf32, #tpu.memory_space<vmem>>, %arg10: memref<9x256xf32, #tpu.memory_space<vmem>>, %arg11: memref<9x1xf32, #tpu.memory_space<vmem>>, %arg12: memref<9x256xf32, #tpu.memory_space<vmem>>) attributes {dimension_semantics = [#tpu.dimension_semantics<parallel>], iteration_bounds = array<i64: 3>, scalar_prefetch = 0 : i64, scratch_operands = 0 : i64, tpu.core_type = #tpu.core_type<tc>, window_params = [{transform_indices = @transform_0, window_bounds = array<i64: 256, 9>}, {pipeline_mode = #tpu.pipeline_mode<synchronous>, transform_indices = @transform_1, window_bounds = array<i64: 9, 128>}, {pipeline_mode = #tpu.pipeline_mode<synchronous>, transform_indices = @transform_2, window_bounds = array<i64: 1, 128>}, {pipeline_mode = #tpu.pipeline_mode<synchronous>, transform_indices = @transform_3, window_bounds = array<i64: 128, 256>}, {pipeline_mode = #tpu.pipeline_mode<synchronous>, transform_indices = @transform_4, window_bounds = array<i64: 1, 256>}, {pipeline_mode = #tpu.pipeline_mode<synchronous>, transform_indices = @transform_5, window_bounds = array<i64: 256, 256>}, {pipeline_mode = #tpu.pipeline_mode<synchronous>, transform_indices = @transform_6, window_bounds = array<i64: 1, 256>}, {pipeline_mode = #tpu.pipeline_mode<synchronous>, transform_indices = @transform_7, window_bounds = array<i64: 256, 256>}, {pipeline_mode = #tpu.pipeline_mode<synchronous>, transform_indices = @transform_8, window_bounds = array<i64: 1, 256>}, {pipeline_mode = #tpu.pipeline_mode<synchronous>, transform_indices = @transform_9, window_bounds = array<i64: 9, 256>}, {pipeline_mode = #tpu.pipeline_mode<synchronous>, transform_indices = @transform_10, window_bounds = array<i64: 9, 1>}, {transform_indices = @transform_11, window_bounds = array<i64: 9, 256>}]} {
    %c0 = arith.constant 0 : index
    %c0_0 = arith.constant 0 : index
    %0 = vector.load %arg1[%c0, %c0_0] : memref<256x9xf32, #tpu.memory_space<vmem>>, vector<256x9xf32>
    %c0_1 = arith.constant 0 : index
    %c0_2 = arith.constant 0 : index
    %1 = vector.load %arg2[%c0_1, %c0_2] : memref<9x128xf32, #tpu.memory_space<vmem>>, vector<9x128xf32>
    %cst = arith.constant dense<0.000000e+00> : vector<256x128xf32>
    %2 = tpu.matmul %0, %1, %cst {dimension_numbers = #tpu.dot_dimension_numbers<[1], [0], [0], [1], [0, 0, 1, 1], [], []>} : vector<256x9xf32>, vector<9x128xf32>, vector<256x128xf32> -> vector<256x128xf32>
    %c0_3 = arith.constant 0 : index
    %c0_4 = arith.constant 0 : index
    %3 = vector.load %arg3[%c0_3, %c0_4] : memref<1x128xf32, #tpu.memory_space<vmem>>, vector<1x128xf32>
    %4 = vector.broadcast %3 : vector<1x128xf32> to vector<256x128xf32>
    %5 = arith.addf %2, %4 : vector<256x128xf32>
    %cst_5 = arith.constant 0.000000e+00 : f32
    %6 = vector.broadcast %cst_5 : f32 to vector<256x128xf32>
    %7 = arith.maximumf %5, %6 : vector<256x128xf32>
    %c0_6 = arith.constant 0 : index
    %c0_7 = arith.constant 0 : index
    %8 = vector.load %arg4[%c0_6, %c0_7] : memref<128x256xf32, #tpu.memory_space<vmem>>, vector<128x256xf32>
    %cst_8 = arith.constant dense<0.000000e+00> : vector<256x256xf32>
    %9 = tpu.matmul %7, %8, %cst_8 {dimension_numbers = #tpu.dot_dimension_numbers<[1], [0], [0], [1], [0, 0, 1, 1], [], []>} : vector<256x128xf32>, vector<128x256xf32>, vector<256x256xf32> -> vector<256x256xf32>
    %c0_9 = arith.constant 0 : index
    %c0_10 = arith.constant 0 : index
    %10 = vector.load %arg5[%c0_9, %c0_10] : memref<1x256xf32, #tpu.memory_space<vmem>>, vector<1x256xf32>
    %11 = vector.broadcast %10 : vector<1x256xf32> to vector<256x256xf32>
    %12 = arith.addf %9, %11 : vector<256x256xf32>
    %cst_11 = arith.constant 0.000000e+00 : f32
    %13 = vector.broadcast %cst_11 : f32 to vector<256x256xf32>
    %14 = arith.maximumf %12, %13 : vector<256x256xf32>
    %c0_12 = arith.constant 0 : index
    %c0_13 = arith.constant 0 : index
    %15 = vector.load %arg6[%c0_12, %c0_13] : memref<256x256xf32, #tpu.memory_space<vmem>>, vector<256x256xf32>
    %cst_14 = arith.constant dense<0.000000e+00> : vector<256x256xf32>
    %16 = tpu.matmul %14, %15, %cst_14 {dimension_numbers = #tpu.dot_dimension_numbers<[1], [0], [0], [1], [0, 0, 1, 1], [], []>} : vector<256x256xf32>, vector<256x256xf32>, vector<256x256xf32> -> vector<256x256xf32>
    %c0_15 = arith.constant 0 : index
    %c0_16 = arith.constant 0 : index
    %17 = vector.load %arg7[%c0_15, %c0_16] : memref<1x256xf32, #tpu.memory_space<vmem>>, vector<1x256xf32>
    %18 = vector.broadcast %17 : vector<1x256xf32> to vector<256x256xf32>
    %19 = arith.addf %16, %18 : vector<256x256xf32>
    %cst_17 = arith.constant 0.000000e+00 : f32
    %20 = vector.broadcast %cst_17 : f32 to vector<256x256xf32>
    %21 = arith.maximumf %19, %20 : vector<256x256xf32>
    %c0_18 = arith.constant 0 : index
    %c0_19 = arith.constant 0 : index
    %22 = vector.load %arg8[%c0_18, %c0_19] : memref<256x256xf32, #tpu.memory_space<vmem>>, vector<256x256xf32>
    %cst_20 = arith.constant dense<0.000000e+00> : vector<256x256xf32>
    %23 = tpu.matmul %21, %22, %cst_20 {dimension_numbers = #tpu.dot_dimension_numbers<[1], [0], [0], [1], [0, 0, 1, 1], [], []>} : vector<256x256xf32>, vector<256x256xf32>, vector<256x256xf32> -> vector<256x256xf32>
    %c0_21 = arith.constant 0 : index
    %c0_22 = arith.constant 0 : index
    %24 = vector.load %arg9[%c0_21, %c0_22] : memref<1x256xf32, #tpu.memory_space<vmem>>, vector<1x256xf32>
    %25 = vector.broadcast %24 : vector<1x256xf32> to vector<256x256xf32>
    %26 = arith.addf %23, %25 : vector<256x256xf32>
    %cst_23 = arith.constant 0.000000e+00 : f32
    %27 = vector.broadcast %cst_23 : f32 to vector<256x256xf32>
    %28 = arith.maximumf %26, %27 : vector<256x256xf32>
    %c0_24 = arith.constant 0 : index
    %c0_25 = arith.constant 0 : index
    %29 = vector.load %arg10[%c0_24, %c0_25] : memref<9x256xf32, #tpu.memory_space<vmem>>, vector<9x256xf32>
    %cst_26 = arith.constant dense<0.000000e+00> : vector<9x256xf32>
    %30 = tpu.matmul %29, %28, %cst_26 {dimension_numbers = #tpu.dot_dimension_numbers<[1], [1], [0], [0], [0, 0, 1, 0], [], []>} : vector<9x256xf32>, vector<256x256xf32>, vector<9x256xf32> -> vector<9x256xf32>
    %c0_27 = arith.constant 0 : index
    %c0_28 = arith.constant 0 : index
    %31 = vector.load %arg11[%c0_27, %c0_28] : memref<9x1xf32, #tpu.memory_space<vmem>>, vector<9x1xf32>
    %32 = vector.broadcast %31 : vector<9x1xf32> to vector<9x256xf32>
    %33 = arith.addf %30, %32 : vector<9x256xf32>
    %c0_29 = arith.constant 0 : index
    %c0_30 = arith.constant 0 : index
    %34 = vector.load %arg12[%c0_29, %c0_30] : memref<9x256xf32, #tpu.memory_space<vmem>>, vector<9x256xf32>
    tpu.vector_store %arg12[%c0_29, %c0_30], %33 {strides = array<i32>} : memref<9x256xf32, #tpu.memory_space<vmem>>, vector<9x256xf32>,
    return
  }
  func.func @transform_0(%arg0: i32) -> (i32, i32) {
    %c0_i32 = arith.constant 0 : i32
    %c0_i32_0 = arith.constant 0 : i32
    return %arg0, %c0_i32 : i32, i32
  }
  func.func @transform_1(%arg0: i32) -> (i32, i32) {
    %c0_i32 = arith.constant 0 : i32
    %c0_i32_0 = arith.constant 0 : i32
    %c0_i32_1 = arith.constant 0 : i32
    return %c0_i32, %c0_i32_0 : i32, i32
  }
  func.func @transform_2(%arg0: i32) -> (i32, i32) {
    %c0_i32 = arith.constant 0 : i32
    %c0_i32_0 = arith.constant 0 : i32
    %c0_i32_1 = arith.constant 0 : i32
    return %c0_i32, %c0_i32_0 : i32, i32
  }
  func.func @transform_3(%arg0: i32) -> (i32, i32) {
    %c0_i32 = arith.constant 0 : i32
    %c0_i32_0 = arith.constant 0 : i32
    %c0_i32_1 = arith.constant 0 : i32
    return %c0_i32, %c0_i32_0 : i32, i32
  }
  func.func @transform_4(%arg0: i32) -> (i32, i32) {
    %c0_i32 = arith.constant 0 : i32
    %c0_i32_0 = arith.constant 0 : i32
    %c0_i32_1 = arith.constant 0 : i32
    return %c0_i32, %c0_i32_0 : i32, i32
  }
  func.func @transform_5(%arg0: i32) -> (i32, i32) {
    %c0_i32 = arith.constant 0 : i32
    %c0_i32_0 = arith.constant 0 : i32
    %c0_i32_1 = arith.constant 0 : i32
    return %c0_i32, %c0_i32_0 : i32, i32
  }
  func.func @transform_6(%arg0: i32) -> (i32, i32) {
    %c0_i32 = arith.constant 0 : i32
    %c0_i32_0 = arith.constant 0 : i32
    %c0_i32_1 = arith.constant 0 : i32
    return %c0_i32, %c0_i32_0 : i32, i32
  }
  func.func @transform_7(%arg0: i32) -> (i32, i32) {
    %c0_i32 = arith.constant 0 : i32
    %c0_i32_0 = arith.constant 0 : i32
    %c0_i32_1 = arith.constant 0 : i32
    return %c0_i32, %c0_i32_0 : i32, i32
  }
  func.func @transform_8(%arg0: i32) -> (i32, i32) {
    %c0_i32 = arith.constant 0 : i32
    %c0_i32_0 = arith.constant 0 : i32
    %c0_i32_1 = arith.constant 0 : i32
    return %c0_i32, %c0_i32_0 : i32, i32
  }
  func.func @transform_9(%arg0: i32) -> (i32, i32) {
    %c0_i32 = arith.constant 0 : i32
    %c0_i32_0 = arith.constant 0 : i32
    %c0_i32_1 = arith.constant 0 : i32
    return %c0_i32, %c0_i32_0 : i32, i32
  }
  func.func @transform_10(%arg0: i32) -> (i32, i32) {
    %c0_i32 = arith.constant 0 : i32
    %c0_i32_0 = arith.constant 0 : i32
    %c0_i32_1 = arith.constant 0 : i32
    return %c0_i32, %c0_i32_0 : i32, i32
  }
  func.func @transform_11(%arg0: i32) -> (i32, i32) {
    %c0_i32 = arith.constant 0 : i32
    %c0_i32_0 = arith.constant 0 : i32
    return %c0_i32, %arg0 : i32, i32
  }
}

</mosaic_0001>

<llo_original>
// kernel: tpu_custom_call.1
$region0: #{tpu_custom_call.1}
  #allocation0 [shape = 'u32[]', space=smem, size = 0x4, offset = 0x4, fixed_abs, tag = 'smem constant byte address 0x4 - core index']
  #allocation1 [shape = 'u32[72,128]{1,0:T(1,128)}', space=vmem, size = 0x9000, scoped, tag = 'internal scratch']
  %s0 = inlined_call_operand.vmem [shape: f32[768,9], index: 0, kind: input, shape index: {}]
  %s1 = inlined_call_operand.vmem [shape: f32[9,128], index: 1, kind: input, shape index: {}]
  %s2 = inlined_call_operand.vmem [shape: f32[1,128], index: 2, kind: input, shape index: {}]
  %s3 = inlined_call_operand.vmem [shape: f32[128,256], index: 3, kind: input, shape index: {}]
  %s4 = inlined_call_operand.vmem [shape: f32[1,256], index: 4, kind: input, shape index: {}]
  %s5 = inlined_call_operand.vmem [shape: f32[256,256], index: 5, kind: input, shape index: {}]
  %s6 = inlined_call_operand.vmem [shape: f32[1,256], index: 6, kind: input, shape index: {}]
  %s7 = inlined_call_operand.hbm [shape: f32[256,256], index: 7, kind: input, shape index: {}]
  %s8 = inlined_call_operand.vmem [shape: f32[1,256], index: 8, kind: input, shape index: {}]
  %s9 = inlined_call_operand.vmem [shape: f32[9,256], index: 9, kind: input, shape index: {}]
  %s10 = inlined_call_operand.vmem [shape: f32[9,1], index: 10, kind: input, shape index: {}]
  %s11 = inlined_call_operand.hbm [shape: f32[9,768], index: 11, kind: output, shape index: {}]
  %s12 = sld [smem:[#allocation0]]
  $region81: #{tpu_custom_call.1} parent=0
    _
  %s14 = ssub.s32 1, %s12
  %s15 = scalar_select 0, %s14, %s12
  $region1: #{tpu_custom_call.1} parent=0
    #allocation2 [shape = 'u8[262144]{0}', space=vmem, size = 0x40000, scoped, tag = 'input window, operand 7, single buffered']
    #allocation3 [shape = 's32[2]{0}', space=sflag, size = 0x8, scoped, tag = 'scoped memory for tpu_custom_call.1']
    #allocation4 [shape = 's32[2]{0}', space=sflag, size = 0x8, scoped, tag = 'scoped memory for tpu_custom_call.1']
    #allocation5 [shape = 'u8[32768]{0}', space=vmem, size = 0x8000, scoped, tag = 'output window, operand 0']
    %16 = vsyncpa [#allocation3], 0
    %17 = vsyncpa [#allocation4], 0
    %s18 = scalar_lea.sflag [#allocation4], 1
    %19 = vsyncpa %s18, 0
    loop: start=0, step=1, limit=5
    $region2: #{tpu_custom_call.1} parent=1 // loop_pre_header
      _
    $region3: #{tpu_custom_call.1} parent=1 // loop_header
      %s21 = sphi 0, %s25
      %p22 = scmp.ge.s32.totalorder %s21, 5
      %s31 = sphi 0, %s33
      %s34 = sphi 0, %s31
      %s35 = sphi 0, %s34
      %s51 = sphi 0, %s35
      %s55 = sphi 0, %s55
      %s57 = sphi 0, %s55
      %s58 = sphi 0, %s57
      %s72 = sphi 0, %s58
      %s76 = sphi 0, %s76
      %s78 = sphi 0, %s76
      %s79 = sphi 0, %s78
      %s93 = sphi 0, %s79
      %s97 = sphi 0, %s97
      %s99 = sphi 0, %s97
      %s100 = sphi 0, %s99
      %s114 = sphi 0, %s100
      %s118 = sphi 0, %s118
      %s120 = sphi 0, %s118
      %s121 = sphi 0, %s120
      %s135 = sphi 0, %s121
      %s139 = sphi 0, %s139
      %s141 = sphi 0, %s139
      %s142 = sphi 0, %s141
      %s156 = sphi 0, %s142
      %s160 = sphi 0, %s160
      %s162 = sphi 0, %s160
      %s163 = sphi 0, %s162
      %s177 = sphi 0, %s163
      %s181 = sphi 0, %s181
      %s183 = sphi 0, %s181
      %s184 = sphi 0, %s183
      %s198 = sphi 0, %s184
      %s202 = sphi 0, %s202
      %s204 = sphi 0, %s202
      %s205 = sphi 0, %s204
      %s219 = sphi 0, %s205
      %s223 = sphi 0, %s223
      %s225 = sphi 0, %s223
      %s226 = sphi 0, %s225
      %s240 = sphi 0, %s226
      %s244 = sphi 0, %s244
      %s246 = sphi 0, %s244
      %s247 = sphi 0, %s246
      %s261 = sphi 0, %s247
      %s267 = sphi 0, %s269
      %s270 = sphi 0, %s267
      %s271 = sphi 0, %s270
      %s287 = sphi 0, %s271
    $region4: #{tpu_custom_call.1} parent=1 // loop_header_branch
      %24 = sbr.rel (%p22) target = $region8
    $region5: #{tpu_custom_call.1} parent=1 // loop_body
      %s26 = ssub.s32 %s21, 1
      %s27 = ssub.s32 %s21, 2
      %s28 = sadd.s32 %s21, 1
      %s29 = ssub.s32 %s21, %s28
      %p30 = scmp.eq.s32.totalorder %s29, 0
      %s32 = sadd.s32 %s31, 1
      %s33 = scalar_select %p30, %s31, %s32
      %p36 = pneg %p30
      %p37 = scmp.eq.s32.totalorder %s21, 2
      %p38 = por %p36, %p37
      %p39 = scmp.ne.s32.totalorder %s31, %s34
      %p40 = scmp.eq.s32.totalorder %s21, 0
      %p41 = por %p39, %p40
      %p42 = scmp.ne.s32.totalorder %s31, %s34
      %p43 = scmp.eq.s32.totalorder %s26, 2
      %p44 = por %p42, %p43
      %p45 = scmp.ne.s32.totalorder %s34, %s35
      %p46 = scmp.eq.s32.totalorder %s26, 0
      %p47 = por %p45, %p46
      %p48 = scmp.ne.s32.totalorder %s34, %s35
      %p49 = scmp.eq.s32.totalorder %s27, 2
      %p50 = por %p48, %p49
      %p52 = scmp.ne.s32.totalorder %s35, %s51
      %p53 = scmp.eq.s32.totalorder %s27, 0
      %p54 = por %p52, %p53
      %s56 = sadd.s32 %s55, 1
      %p59 = scmp.eq.s32.totalorder %s21, 2
      %p60 = scmp.ne.s32.totalorder %s55, %s57
      %p61 = scmp.eq.s32.totalorder %s21, 0
      %p62 = por %p60, %p61
      %p63 = scmp.ne.s32.totalorder %s55, %s57
      %p64 = scmp.eq.s32.totalorder %s26, 2
      %p65 = por %p63, %p64
      %p66 = scmp.ne.s32.totalorder %s57, %s58
      %p67 = scmp.eq.s32.totalorder %s26, 0
      %p68 = por %p66, %p67
      %p69 = scmp.ne.s32.totalorder %s57, %s58
      %p70 = scmp.eq.s32.totalorder %s27, 2
      %p71 = por %p69, %p70
      %p73 = scmp.ne.s32.totalorder %s58, %s72
      %p74 = scmp.eq.s32.totalorder %s27, 0
      %p75 = por %p73, %p74
      %s77 = sadd.s32 %s76, 1
      %p80 = scmp.eq.s32.totalorder %s21, 2
      %p81 = scmp.ne.s32.totalorder %s76, %s78
      %p82 = scmp.eq.s32.totalorder %s21, 0
      %p83 = por %p81, %p82
      %p84 = scmp.ne.s32.totalorder %s76, %s78
      %p85 = scmp.eq.s32.totalorder %s26, 2
      %p86 = por %p84, %p85
      %p87 = scmp.ne.s32.totalorder %s78, %s79
      %p88 = scmp.eq.s32.totalorder %s26, 0
      %p89 = por %p87, %p88
      %p90 = scmp.ne.s32.totalorder %s78, %s79
      %p91 = scmp.eq.s32.totalorder %s27, 2
      %p92 = por %p90, %p91
      %p94 = scmp.ne.s32.totalorder %s79, %s93
      %p95 = scmp.eq.s32.totalorder %s27, 0
      %p96 = por %p94, %p95
      %s98 = sadd.s32 %s97, 1
      %p101 = scmp.eq.s32.totalorder %s21, 2
      %p102 = scmp.ne.s32.totalorder %s97, %s99
      %p103 = scmp.eq.s32.totalorder %s21, 0
      %p104 = por %p102, %p103
      %p105 = scmp.ne.s32.totalorder %s97, %s99
      %p106 = scmp.eq.s32.totalorder %s26, 2
      %p107 = por %p105, %p106
      %p108 = scmp.ne.s32.totalorder %s99, %s100
      %p109 = scmp.eq.s32.totalorder %s26, 0
      %p110 = por %p108, %p109
      %p111 = scmp.ne.s32.totalorder %s99, %s100
      %p112 = scmp.eq.s32.totalorder %s27, 2
      %p113 = por %p111, %p112
      %p115 = scmp.ne.s32.totalorder %s100, %s114
      %p116 = scmp.eq.s32.totalorder %s27, 0
      %p117 = por %p115, %p116
      %s119 = sadd.s32 %s118, 1
      %p122 = scmp.eq.s32.totalorder %s21, 2
      %p123 = scmp.ne.s32.totalorder %s118, %s120
      %p124 = scmp.eq.s32.totalorder %s21, 0
      %p125 = por %p123, %p124
      %p126 = scmp.ne.s32.totalorder %s118, %s120
      %p127 = scmp.eq.s32.totalorder %s26, 2
      %p128 = por %p126, %p127
      %p129 = scmp.ne.s32.totalorder %s120, %s121
      %p130 = scmp.eq.s32.totalorder %s26, 0
      %p131 = por %p129, %p130
      %p132 = scmp.ne.s32.totalorder %s120, %s121
      %p133 = scmp.eq.s32.totalorder %s27, 2
      %p134 = por %p132, %p133
      %p136 = scmp.ne.s32.totalorder %s121, %s135
      %p137 = scmp.eq.s32.totalorder %s27, 0
      %p138 = por %p136, %p137
      %s140 = sadd.s32 %s139, 1
      %p143 = scmp.eq.s32.totalorder %s21, 2
      %p144 = scmp.ne.s32.totalorder %s139, %s141
      %p145 = scmp.eq.s32.totalorder %s21, 0
      %p146 = por %p144, %p145
      %p147 = scmp.ne.s32.totalorder %s139, %s141
      %p148 = scmp.eq.s32.totalorder %s26, 2
      %p149 = por %p147, %p148
      %p150 = scmp.ne.s32.totalorder %s141, %s142
      %p151 = scmp.eq.s32.totalorder %s26, 0
      %p152 = por %p150, %p151
      %p153 = scmp.ne.s32.totalorder %s141, %s142
      %p154 = scmp.eq.s32.totalorder %s27, 2
      %p155 = por %p153, %p154
      %p157 = scmp.ne.s32.totalorder %s142, %s156
      %p158 = scmp.eq.s32.totalorder %s27, 0
      %p159 = por %p157, %p158
      %s161 = sadd.s32 %s160, 1
      %p164 = scmp.eq.s32.totalorder %s21, 2
      %p165 = scmp.ne.s32.totalorder %s160, %s162
      %p166 = scmp.eq.s32.totalorder %s21, 0
      %p167 = por %p165, %p166
      %p168 = scmp.ne.s32.totalorder %s160, %s162
      %p169 = scmp.eq.s32.totalorder %s26, 2
      %p170 = por %p168, %p169
      %p171 = scmp.ne.s32.totalorder %s162, %s163
      %p172 = scmp.eq.s32.totalorder %s26, 0
      %p173 = por %p171, %p172
      %p174 = scmp.ne.s32.totalorder %s162, %s163
      %p175 = scmp.eq.s32.totalorder %s27, 2
      %p176 = por %p174, %p175
      %p178 = scmp.ne.s32.totalorder %s163, %s177
      %p179 = scmp.eq.s32.totalorder %s27, 0
      %p180 = por %p178, %p179
      %s182 = sadd.s32 %s181, 1
      %p185 = scmp.eq.s32.totalorder %s21, 2
      %p186 = scmp.ne.s32.totalorder %s181, %s183
      %p187 = scmp.eq.s32.totalorder %s21, 0
      %p188 = por %p186, %p187
      %p189 = scmp.ne.s32.totalorder %s181, %s183
      %p190 = scmp.eq.s32.totalorder %s26, 2
      %p191 = por %p189, %p190
      %p192 = scmp.ne.s32.totalorder %s183, %s184
      %p193 = scmp.eq.s32.totalorder %s26, 0
      %p194 = por %p192, %p193
      %p195 = scmp.ne.s32.totalorder %s183, %s184
      %p196 = scmp.eq.s32.totalorder %s27, 2
      %p197 = por %p195, %p196
      %p199 = scmp.ne.s32.totalorder %s184, %s198
      %p200 = scmp.eq.s32.totalorder %s27, 0
      %p201 = por %p199, %p200
      %s203 = sadd.s32 %s202, 1
      %p206 = scmp.eq.s32.totalorder %s21, 2
      %p207 = scmp.ne.s32.totalorder %s202, %s204
      %p208 = scmp.eq.s32.totalorder %s21, 0
      %p209 = por %p207, %p208
      %p210 = scmp.ne.s32.totalorder %s202, %s204
      %p211 = scmp.eq.s32.totalorder %s26, 2
      %p212 = por %p210, %p211
      %p213 = scmp.ne.s32.totalorder %s204, %s205
      %p214 = scmp.eq.s32.totalorder %s26, 0
      %p215 = por %p213, %p214
      %p216 = scmp.ne.s32.totalorder %s204, %s205
      %p217 = scmp.eq.s32.totalorder %s27, 2
      %p218 = por %p216, %p217
      %p220 = scmp.ne.s32.totalorder %s205, %s219
      %p221 = scmp.eq.s32.totalorder %s27, 0
      %p222 = por %p220, %p221
      %s224 = sadd.s32 %s223, 1
      %p227 = scmp.eq.s32.totalorder %s21, 2
      %p228 = scmp.ne.s32.totalorder %s223, %s225
      %p229 = scmp.eq.s32.totalorder %s21, 0
      %p230 = por %p228, %p229
      %p231 = scmp.ne.s32.totalorder %s223, %s225
      %p232 = scmp.eq.s32.totalorder %s26, 2
      %p233 = por %p231, %p232
      %p234 = scmp.ne.s32.totalorder %s225, %s226
      %p235 = scmp.eq.s32.totalorder %s26, 0
      %p236 = por %p234, %p235
      %p237 = scmp.ne.s32.totalorder %s225, %s226
      %p238 = scmp.eq.s32.totalorder %s27, 2
      %p239 = por %p237, %p238
      %p241 = scmp.ne.s32.totalorder %s226, %s240
      %p242 = scmp.eq.s32.totalorder %s27, 0
      %p243 = por %p241, %p242
      %s245 = sadd.s32 %s244, 1
      %p248 = scmp.eq.s32.totalorder %s21, 2
      %p249 = scmp.ne.s32.totalorder %s244, %s246
      %p250 = scmp.eq.s32.totalorder %s21, 0
      %p251 = por %p249, %p250
      %p252 = scmp.ne.s32.totalorder %s244, %s246
      %p253 = scmp.eq.s32.totalorder %s26, 2
      %p254 = por %p252, %p253
      %p255 = scmp.ne.s32.totalorder %s246, %s247
      %p256 = scmp.eq.s32.totalorder %s26, 0
      %p257 = por %p255, %p256
      %p258 = scmp.ne.s32.totalorder %s246, %s247
      %p259 = scmp.eq.s32.totalorder %s27, 2
      %p260 = por %p258, %p259
      %p262 = scmp.ne.s32.totalorder %s247, %s261
      %p263 = scmp.eq.s32.totalorder %s27, 0
      %p264 = por %p262, %p263
      %s265 = ssub.s32 %s21, %s28
      %p266 = scmp.eq.s32.totalorder %s265, 0
      %s268 = sadd.s32 %s267, 1
      %s269 = scalar_select %p266, %s267, %s268
      %p272 = pneg %p266
      %p273 = scmp.eq.s32.totalorder %s21, 2
      %p274 = por %p272, %p273
      %p275 = scmp.ne.s32.totalorder %s267, %s270
      %p276 = scmp.eq.s32.totalorder %s21, 0
      %p277 = por %p275, %p276
      %p278 = scmp.ne.s32.totalorder %s267, %s270
      %p279 = scmp.eq.s32.totalorder %s26, 2
      %p280 = por %p278, %p279
      %p281 = scmp.ne.s32.totalorder %s270, %s271
      %p282 = scmp.eq.s32.totalorder %s26, 0
      %p283 = por %p281, %p282
      %p284 = scmp.ne.s32.totalorder %s270, %s271
      %p285 = scmp.eq.s32.totalorder %s27, 2
      %p286 = por %p284, %p285
      %p288 = scmp.ne.s32.totalorder %s271, %s287
      %p289 = scmp.eq.s32.totalorder %s27, 0
      %p290 = por %p288, %p289
      %p291 = scmp.le.s32.totalorder 1, %s21
      %p292 = scmp.lt.s32.totalorder %s21, 4
      %p293 = pnand %p291, %p292
      %p294 = pneg %p293
      // Predicated region
      $region9: #{tpu_custom_call.1} parent=5 // pred_check
        _
      $region10: #{tpu_custom_call.1} parent=5 // pred_check_branch
        %296 = sbr.rel (%p293) target = $region12
      $region11: #{tpu_custom_call.1} parent=5 // pred_region
        %s297 = ssub.s32 %s21, 1
        // Predicated region
        $region13: #{tpu_custom_call.1} parent=11 // pred_check
          %p298 = pneg %p68
        $region14: #{tpu_custom_call.1} parent=11 // pred_check_branch
          %300 = sbr.rel (%p298) target = $region16
        $region15: #{tpu_custom_call.1} parent=11 // pred_region
          _
        $region16: #{tpu_custom_call.1} parent=11 // pred_fallthru
          _
        // Predicated region
        $region17: #{tpu_custom_call.1} parent=11 // pred_check
          %p301 = pneg %p89
        $region18: #{tpu_custom_call.1} parent=11 // pred_check_branch
          %303 = sbr.rel (%p301) target = $region20
        $region19: #{tpu_custom_call.1} parent=11 // pred_region
          _
        $region20: #{tpu_custom_call.1} parent=11 // pred_fallthru
          _
        // Predicated region
        $region21: #{tpu_custom_call.1} parent=11 // pred_check
          %p304 = pneg %p110
        $region22: #{tpu_custom_call.1} parent=11 // pred_check_branch
          %306 = sbr.rel (%p304) target = $region24
        $region23: #{tpu_custom_call.1} parent=11 // pred_region
          _
        $region24: #{tpu_custom_call.1} parent=11 // pred_fallthru
          _
        // Predicated region
        $region25: #{tpu_custom_call.1} parent=11 // pred_check
          %p307 = pneg %p131
        $region26: #{tpu_custom_call.1} parent=11 // pred_check_branch
          %309 = sbr.rel (%p307) target = $region28
        $region27: #{tpu_custom_call.1} parent=11 // pred_region
          _
        $region28: #{tpu_custom_call.1} parent=11 // pred_fallthru
          _
        // Predicated region
        $region29: #{tpu_custom_call.1} parent=11 // pred_check
          %p310 = pneg %p152
        $region30: #{tpu_custom_call.1} parent=11 // pred_check_branch
          %312 = sbr.rel (%p310) target = $region32
        $region31: #{tpu_custom_call.1} parent=11 // pred_region
          _
        $region32: #{tpu_custom_call.1} parent=11 // pred_fallthru
          _
        // Predicated region
        $region33: #{tpu_custom_call.1} parent=11 // pred_check
          %p313 = pneg %p173
        $region34: #{tpu_custom_call.1} parent=11 // pred_check_branch
          %315 = sbr.rel (%p313) target = $region36
        $region35: #{tpu_custom_call.1} parent=11 // pred_region
          _
        $region36: #{tpu_custom_call.1} parent=11 // pred_fallthru
          _
        // Predicated region
        $region37: #{tpu_custom_call.1} parent=11 // pred_check
          %p316 = pneg %p194
        $region38: #{tpu_custom_call.1} parent=11 // pred_check_branch
          %318 = sbr.rel (%p316) target = $region40
        $region39: #{tpu_custom_call.1} parent=11 // pred_region
          %320 = vsyncadd [#allocation3], 0
          %s321 = sshll.u32 %s7, 4
          %s322 = int_to_ptr.hbm [resolvable:$true] %s321
          %s323 = sshll.u32 [#allocation2], 4
          %s324 = int_to_ptr.vmem [resolvable:$true] %s323
          %329 = dma.hbm_to_vmem [thread:$0]  %s322, 8192, %s324, [#allocation3], 256, 256, 16
        $region40: #{tpu_custom_call.1} parent=11 // pred_fallthru
          _
        // Predicated region
        $region41: #{tpu_custom_call.1} parent=11 // pred_check
          %p330 = pneg %p215
        $region42: #{tpu_custom_call.1} parent=11 // pred_check_branch
          %332 = sbr.rel (%p330) target = $region44
        $region43: #{tpu_custom_call.1} parent=11 // pred_region
          _
        $region44: #{tpu_custom_call.1} parent=11 // pred_fallthru
          _
        // Predicated region
        $region45: #{tpu_custom_call.1} parent=11 // pred_check
          %p333 = pneg %p236
        $region46: #{tpu_custom_call.1} parent=11 // pred_check_branch
          %335 = sbr.rel (%p333) target = $region48
        $region47: #{tpu_custom_call.1} parent=11 // pred_region
          _
        $region48: #{tpu_custom_call.1} parent=11 // pred_fallthru
          _
        // Predicated region
        $region49: #{tpu_custom_call.1} parent=11 // pred_check
          %p336 = pneg %p257
        $region50: #{tpu_custom_call.1} parent=11 // pred_check_branch
          %338 = sbr.rel (%p336) target = $region52
        $region51: #{tpu_custom_call.1} parent=11 // pred_region
          _
        $region52: #{tpu_custom_call.1} parent=11 // pred_fallthru
          _
      $region12: #{tpu_custom_call.1} parent=5 // pred_fallthru
        _
      %p339 = scmp.lt.s32.totalorder %s21, 3
      // Predicated region
      $region53: #{tpu_custom_call.1} parent=5 // pred_check
        %p340 = pneg %p339
      $region54: #{tpu_custom_call.1} parent=5 // pred_check_branch
        %342 = sbr.rel (%p340) target = $region56
      $region55: #{tpu_custom_call.1} parent=5 // pred_region
        // Predicated region
        $region57: #{tpu_custom_call.1} parent=55 // pred_check
          %p343 = pneg %p41
        $region58: #{tpu_custom_call.1} parent=55 // pred_check_branch
          %345 = sbr.rel (%p343) target = $region60
        $region59: #{tpu_custom_call.1} parent=55 // pred_region
          %s346 = smul.u32 32, %s21
          %p347 = scmp.lt.s32.totalorder %s346, 95
          %s348 = scalar_select %p347, %s346, 95
          %s349 = smul.addr %s348, 8
          %s350 = scalar_lea.vmem %s0, %s349
          %s351 = smul.u32 32, %s21
        $region60: #{tpu_custom_call.1} parent=55 // pred_fallthru
          _
      $region56: #{tpu_custom_call.1} parent=5 // pred_fallthru
        _
      %p352 = scmp.le.s32.totalorder 1, %s21
      %p353 = scmp.lt.s32.totalorder %s21, 4
      %p354 = pnand %p352, %p353
      %p355 = pneg %p354
      // Predicated region
      $region61: #{tpu_custom_call.1} parent=5 // pred_check
        _
      $region62: #{tpu_custom_call.1} parent=5 // pred_check_branch
        %357 = sbr.rel (%p354) target = $region64
      $region63: #{tpu_custom_call.1} parent=5 // pred_region
        %s358 = ssub.s32 %s21, 1
        // Predicated region
        $region65: #{tpu_custom_call.1} parent=63 // pred_check
          %p359 = pneg %p194
        $region66: #{tpu_custom_call.1} parent=63 // pred_check_branch
          %361 = sbr.rel (%p359) target = $region68
        $region67: #{tpu_custom_call.1} parent=63 // pred_region
          %363 = dma.done [#allocation3], 8192
        $region68: #{tpu_custom_call.1} parent=63 // pred_fallthru
          _
        %s364 = smul.u32 32, %s26
        %p365 = scmp.lt.s32.totalorder %s364, 95
        %s366 = scalar_select %p365, %s364, 95
        %s367 = smul.addr %s366, 8
        %s368 = scalar_lea.vmem %s0, %s367
        %p369 = pneg %p47
        %p370 = pneg %p44
        %p371 = pneg %p68
        %p372 = pneg %p65
        %p373 = pneg %p89
        %p374 = pneg %p86
        %p375 = pneg %p110
        %p376 = pneg %p107
        %p377 = pneg %p131
        %p378 = pneg %p128
        %p379 = pneg %p152
        %p380 = pneg %p149
        %p381 = pneg %p173
        %p382 = pneg %p170
        %p383 = pneg %p194
        %p384 = pneg %p191
        %p385 = pneg %p215
        %p386 = pneg %p212
        %p387 = pneg %p236
        %p388 = pneg %p233
        %p389 = pneg %p257
        %p390 = pneg %p254
        %p391 = pneg %p283
        %p392 = pneg %p280
        %s393 = sand.u32 %s270, 1
        %s394 = scalar_lea.sflag [#allocation4], %s393
        %s395 = sand.u32 %s270, 1
        %s396 = smul.addr %s395, 32
        %s397 = scalar_lea.vmem [#allocation5], %s396
        %s398 = smul.u32 32, %s26
        %p399 = scmp.lt.s32.totalorder %s398, 95
        %s400 = scalar_select %p399, %s398, 95
        %s401 = smul.addr %s400, 8
        %s402 = scalar_lea.vmem %s0, %s401
        %s403 = smul.u32 32, %s26
        %s404 = smul.u32 2, %s26
        %v405 = vld [vmem:[%s402] sm:$0xff]
        %v406 = vld [vmem:[%s402 + $0x8] sm:$0xff]
        %v407 = vld [vmem:[%s402 + $0x10] sm:$0xff]
        %v408 = vld [vmem:[%s402 + $0x18] sm:$0xff]
        %v409 = vld [vmem:[%s402 + $0x20] sm:$0xff]
        %v410 = vld [vmem:[%s402 + $0x28] sm:$0xff]
        %v411 = vld [vmem:[%s402 + $0x30] sm:$0xff]
        %v412 = vld [vmem:[%s402 + $0x38] sm:$0xff]
        %v413 = vld [vmem:[%s402 + $0x40] sm:$0xff]
        %v414 = vld [vmem:[%s402 + $0x48] sm:$0xff]
        %v415 = vld [vmem:[%s402 + $0x50] sm:$0xff]
        %v416 = vld [vmem:[%s402 + $0x58] sm:$0xff]
        %v417 = vld [vmem:[%s402 + $0x60] sm:$0xff]
        %v418 = vld [vmem:[%s402 + $0x68] sm:$0xff]
        %v419 = vld [vmem:[%s402 + $0x70] sm:$0xff]
        %v420 = vld [vmem:[%s402 + $0x78] sm:$0xff]
        %v421 = vld [vmem:[%s402 + $0x80] sm:$0xff]
        %v422 = vld [vmem:[%s402 + $0x88] sm:$0xff]
        %v423 = vld [vmem:[%s402 + $0x90] sm:$0xff]
        %v424 = vld [vmem:[%s402 + $0x98] sm:$0xff]
        %v425 = vld [vmem:[%s402 + $0xa0] sm:$0xff]
        %v426 = vld [vmem:[%s402 + $0xa8] sm:$0xff]
        %v427 = vld [vmem:[%s402 + $0xb0] sm:$0xff]
        %v428 = vld [vmem:[%s402 + $0xb8] sm:$0xff]
        %v429 = vld [vmem:[%s402 + $0xc0] sm:$0xff]
        %v430 = vld [vmem:[%s402 + $0xc8] sm:$0xff]
        %v431 = vld [vmem:[%s402 + $0xd0] sm:$0xff]
        %v432 = vld [vmem:[%s402 + $0xd8] sm:$0xff]
        %v433 = vld [vmem:[%s402 + $0xe0] sm:$0xff]
        %v434 = vld [vmem:[%s402 + $0xe8] sm:$0xff]
        %v435 = vld [vmem:[%s402 + $0xf0] sm:$0xff]
        %v436 = vld [vmem:[%s402 + $0xf8] sm:$0xff]
        %v437 = vld [vmem:[%s1] sm:$0xff]
        %v438 = vld [vmem:[%s1 + $0x8] sm:$0x1]
        %v439 = vld [vmem:[%s2] sm:$0x1]
        %v441 = vperm.slane %v439, 0
        %vm443 = vcmask 72704
        %v445 = vsel %vm443, %v405, 0
        %v448 = vsel %vm443, %v406, 0
        %v451 = vsel %vm443, %v407, 0
        %v454 = vsel %vm443, %v408, 0
        %v457 = vsel %vm443, %v409, 0
        %v460 = vsel %vm443, %v410, 0
        %v463 = vsel %vm443, %v411, 0
        %v466 = vsel %vm443, %v412, 0
        %v469 = vsel %vm443, %v413, 0
        %v472 = vsel %vm443, %v414, 0
        %v475 = vsel %vm443, %v415, 0
        %v478 = vsel %vm443, %v416, 0
        %v481 = vsel %vm443, %v417, 0
        %v484 = vsel %vm443, %v418, 0
        %v487 = vsel %vm443, %v419, 0
        %v490 = vsel %vm443, %v420, 0
        %v493 = vsel %vm443, %v421, 0
        %v496 = vsel %vm443, %v422, 0
        %v499 = vsel %vm443, %v423, 0
        %v502 = vsel %vm443, %v424, 0
        %v505 = vsel %vm443, %v425, 0
        %v508 = vsel %vm443, %v426, 0
        %v511 = vsel %vm443, %v427, 0
        %v514 = vsel %vm443, %v428, 0
        %v517 = vsel %vm443, %v429, 0
        %v520 = vsel %vm443, %v430, 0
        %v523 = vsel %vm443, %v431, 0
        %v526 = vsel %vm443, %v432, 0
        %v529 = vsel %vm443, %v433, 0
        %v532 = vsel %vm443, %v434, 0
        %v535 = vsel %vm443, %v435, 0
        %v538 = vsel %vm443, %v436, 0
        %vm540 = vcmask 1040384
        %v542 = vsel %vm540, %v438, 0
        %544 = vmatpush.msra.mxu0 0.0
        %545 = vmatpush.msra.mxu0 0.0
        %546 = vmatpush.msra.mxu0 0.0
        %547 = vmatpush.msra.mxu0 0.0
        %548 = vmatpush.msra.mxu0 0.0
        %549 = vmatpush.msra.mxu0 0.0
        %550 = vmatpush.msra.mxu0 0.0
        %551 = vmatpush.msra.mxu0 0.0
        %552 = vmatpush.msra.mxu0 0.0
        %553 = vmatpush.msra.mxu0 0.0
        %554 = vmatpush.msra.mxu0 0.0
        %555 = vmatpush.msra.mxu0 0.0
        %556 = vmatpush.msra.mxu0 0.0
        %557 = vmatpush.msra.mxu0 0.0
        %558 = vmatpush.msra.mxu0 %v542
        %559 = vmatpush.msra.mxu0 %v437
        %560 = vmatmul.f32.gmra.mxu0 %v445
        %v561 = vpop.f32.mrf.mxu0
        %v562 = vadd.f32 %v441, %v561
        %563 = vmatmul.f32.gmra.mxu0 %v448
        %v564 = vpop.f32.mrf.mxu0
        %v565 = vadd.f32 %v441, %v564
        %566 = vmatmul.f32.gmra.mxu0 %v451
        %v567 = vpop.f32.mrf.mxu0
        %v568 = vadd.f32 %v441, %v567
        %569 = vmatmul.f32.gmra.mxu0 %v454
        %v570 = vpop.f32.mrf.mxu0
        %v571 = vadd.f32 %v441, %v570
        %572 = vmatmul.f32.gmra.mxu0 %v457
        %v573 = vpop.f32.mrf.mxu0
        %v574 = vadd.f32 %v441, %v573
        %575 = vmatmul.f32.gmra.mxu0 %v460
        %v576 = vpop.f32.mrf.mxu0
        %v577 = vadd.f32 %v441, %v576
        %578 = vmatmul.f32.gmra.mxu0 %v463
        %v579 = vpop.f32.mrf.mxu0
        %v580 = vadd.f32 %v441, %v579
        %581 = vmatmul.f32.gmra.mxu0 %v466
        %v582 = vpop.f32.mrf.mxu0
        %v583 = vadd.f32 %v441, %v582
        %584 = vmatmul.f32.gmra.mxu0 %v469
        %v585 = vpop.f32.mrf.mxu0
        %v586 = vadd.f32 %v441, %v585
        %587 = vmatmul.f32.gmra.mxu0 %v472
        %v588 = vpop.f32.mrf.mxu0
        %v589 = vadd.f32 %v441, %v588
        %590 = vmatmul.f32.gmra.mxu0 %v475
        %v591 = vpop.f32.mrf.mxu0
        %v592 = vadd.f32 %v441, %v591
        %593 = vmatmul.f32.gmra.mxu0 %v478
        %v594 = vpop.f32.mrf.mxu0
        %v595 = vadd.f32 %v441, %v594
        %596 = vmatmul.f32.gmra.mxu0 %v481
        %v597 = vpop.f32.mrf.mxu0
        %v598 = vadd.f32 %v441, %v597
        %599 = vmatmul.f32.gmra.mxu0 %v484
        %v600 = vpop.f32.mrf.mxu0
        %v601 = vadd.f32 %v441, %v600
        %602 = vmatmul.f32.gmra.mxu0 %v487
        %v603 = vpop.f32.mrf.mxu0
        %v604 = vadd.f32 %v441, %v603
        %605 = vmatmul.f32.gmra.mxu0 %v490
        %v606 = vpop.f32.mrf.mxu0
        %v607 = vadd.f32 %v441, %v606
        %608 = vmatmul.f32.gmra.mxu0 %v493
        %v609 = vpop.f32.mrf.mxu0
        %v610 = vadd.f32 %v441, %v609
        %611 = vmatmul.f32.gmra.mxu0 %v496
        %v612 = vpop.f32.mrf.mxu0
        %v613 = vadd.f32 %v441, %v612
        %614 = vmatmul.f32.gmra.mxu0 %v499
        %v615 = vpop.f32.mrf.mxu0
        %v616 = vadd.f32 %v441, %v615
        %617 = vmatmul.f32.gmra.mxu0 %v502
        %v618 = vpop.f32.mrf.mxu0
        %v619 = vadd.f32 %v441, %v618
        %620 = vmatmul.f32.gmra.mxu0 %v505
        %v621 = vpop.f32.mrf.mxu0
        %v622 = vadd.f32 %v441, %v621
        %623 = vmatmul.f32.gmra.mxu0 %v508
        %v624 = vpop.f32.mrf.mxu0
        %v625 = vadd.f32 %v441, %v624
        %626 = vmatmul.f32.gmra.mxu0 %v511
        %v627 = vpop.f32.mrf.mxu0
        %v628 = vadd.f32 %v441, %v627
        %629 = vmatmul.f32.gmra.mxu0 %v514
        %v630 = vpop.f32.mrf.mxu0
        %v631 = vadd.f32 %v441, %v630
        %632 = vmatmul.f32.gmra.mxu0 %v517
        %v633 = vpop.f32.mrf.mxu0
        %v634 = vadd.f32 %v441, %v633
        %635 = vmatmul.f32.gmra.mxu0 %v520
        %v636 = vpop.f32.mrf.mxu0
        %v637 = vadd.f32 %v441, %v636
        %638 = vmatmul.f32.gmra.mxu0 %v523
        %v639 = vpop.f32.mrf.mxu0
        %v640 = vadd.f32 %v441, %v639
        %641 = vmatmul.f32.gmra.mxu0 %v526
        %v642 = vpop.f32.mrf.mxu0
        %v643 = vadd.f32 %v441, %v642
        %644 = vmatmul.f32.gmra.mxu0 %v529
        %v645 = vpop.f32.mrf.mxu0
        %v646 = vadd.f32 %v441, %v645
        %647 = vmatmul.f32.gmra.mxu0 %v532
        %v648 = vpop.f32.mrf.mxu0
        %v649 = vadd.f32 %v441, %v648
        %650 = vmatmul.f32.gmra.mxu0 %v535
        %v651 = vpop.f32.mrf.mxu0
        %v652 = vadd.f32 %v441, %v651
        %653 = vmatmul.f32.gmra.mxu0 %v538
        %v654 = vpop.f32.mrf.mxu0
        %v655 = vadd.f32 %v441, %v654
        %656 = vdwg.mxu0
        %v657 = vmax.f32 %v562, 0.0
        %v658 = vmax.f32 %v565, 0.0
        %v659 = vmax.f32 %v568, 0.0
        %v660 = vmax.f32 %v571, 0.0
        %v661 = vmax.f32 %v574, 0.0
        %v662 = vmax.f32 %v577, 0.0
        %v663 = vmax.f32 %v580, 0.0
        %v664 = vmax.f32 %v583, 0.0
        %v665 = vmax.f32 %v586, 0.0
        %v666 = vmax.f32 %v589, 0.0
        %v667 = vmax.f32 %v592, 0.0
        %v668 = vmax.f32 %v595, 0.0
        %v669 = vmax.f32 %v598, 0.0
        %v670 = vmax.f32 %v601, 0.0
        %v671 = vmax.f32 %v604, 0.0
        %v672 = vmax.f32 %v607, 0.0
        %v673 = vmax.f32 %v610, 0.0
        %v674 = vmax.f32 %v613, 0.0
        %v675 = vmax.f32 %v616, 0.0
        %v676 = vmax.f32 %v619, 0.0
        %v677 = vmax.f32 %v622, 0.0
        %v678 = vmax.f32 %v625, 0.0
        %v679 = vmax.f32 %v628, 0.0
        %v680 = vmax.f32 %v631, 0.0
        %v681 = vmax.f32 %v634, 0.0
        %v682 = vmax.f32 %v637, 0.0
        %v683 = vmax.f32 %v640, 0.0
        %v684 = vmax.f32 %v643, 0.0
        %v685 = vmax.f32 %v646, 0.0
        %v686 = vmax.f32 %v649, 0.0
        %v687 = vmax.f32 %v652, 0.0
        %v688 = vmax.f32 %v655, 0.0
        %v689 = vld [vmem:[%s3] sm:$0xff]
        %v690 = vld [vmem:[%s3 + $0x8] sm:$0xff]
        %v691 = vld [vmem:[%s3 + $0x10] sm:$0xff]
        %v692 = vld [vmem:[%s3 + $0x18] sm:$0xff]
        %v693 = vld [vmem:[%s3 + $0x20] sm:$0xff]
        %v694 = vld [vmem:[%s3 + $0x28] sm:$0xff]
        %v695 = vld [vmem:[%s3 + $0x30] sm:$0xff]
        %v696 = vld [vmem:[%s3 + $0x38] sm:$0xff]
        %v697 = vld [vmem:[%s3 + $0x40] sm:$0xff]
        %v698 = vld [vmem:[%s3 + $0x48] sm:$0xff]
        %v699 = vld [vmem:[%s3 + $0x50] sm:$0xff]
        %v700 = vld [vmem:[%s3 + $0x58] sm:$0xff]
        %v701 = vld [vmem:[%s3 + $0x60] sm:$0xff]
        %v702 = vld [vmem:[%s3 + $0x68] sm:$0xff]
        %v703 = vld [vmem:[%s3 + $0x70] sm:$0xff]
        %v704 = vld [vmem:[%s3 + $0x78] sm:$0xff]
        %v705 = vld [vmem:[%s3 + $0x80] sm:$0xff]
        %v706 = vld [vmem:[%s3 + $0x88] sm:$0xff]
        %v707 = vld [vmem:[%s3 + $0x90] sm:$0xff]
        %v708 = vld [vmem:[%s3 + $0x98] sm:$0xff]
        %v709 = vld [vmem:[%s3 + $0xa0] sm:$0xff]
        %v710 = vld [vmem:[%s3 + $0xa8] sm:$0xff]
        %v711 = vld [vmem:[%s3 + $0xb0] sm:$0xff]
        %v712 = vld [vmem:[%s3 + $0xb8] sm:$0xff]
        %v713 = vld [vmem:[%s3 + $0xc0] sm:$0xff]
        %v714 = vld [vmem:[%s3 + $0xc8] sm:$0xff]
        %v715 = vld [vmem:[%s3 + $0xd0] sm:$0xff]
        %v716 = vld [vmem:[%s3 + $0xd8] sm:$0xff]
        %v717 = vld [vmem:[%s3 + $0xe0] sm:$0xff]
        %v718 = vld [vmem:[%s3 + $0xe8] sm:$0xff]
        %v719 = vld [vmem:[%s3 + $0xf0] sm:$0xff]
        %v720 = vld [vmem:[%s3 + $0xf8] sm:$0xff]
        %v721 = vld [vmem:[%s4] sm:$0x3]
        %v723 = vperm.slane %v721, 0
        %v724 = vperm.slane %v721, 1
        %727 = vmatpush.msra.mxu0 %v719
        %728 = vmatpush.msra.mxu0 %v717
        %729 = vmatpush.msra.mxu0 %v715
        %730 = vmatpush.msra.mxu0 %v713
        %731 = vmatpush.msra.mxu0 %v711
        %732 = vmatpush.msra.mxu0 %v709
        %733 = vmatpush.msra.mxu0 %v707
        %734 = vmatpush.msra.mxu0 %v705
        %735 = vmatpush.msra.mxu0 %v703
        %736 = vmatpush.msra.mxu0 %v701
        %737 = vmatpush.msra.mxu0 %v699
        %738 = vmatpush.msra.mxu0 %v697
        %739 = vmatpush.msra.mxu0 %v695
        %740 = vmatpush.msra.mxu0 %v693
        %741 = vmatpush.msra.mxu0 %v691
        %742 = vmatpush.msra.mxu0 %v689
        %743 = vmatmul.f32.gmra.mxu0 %v657
        %v744 = vpop.f32.mrf.mxu0
        %v745 = vadd.f32 %v723, %v744
        %746 = vmatmul.f32.gmra.mxu0 %v658
        %v747 = vpop.f32.mrf.mxu0
        %v748 = vadd.f32 %v723, %v747
        %749 = vmatmul.f32.gmra.mxu0 %v659
        %v750 = vpop.f32.mrf.mxu0
        %v751 = vadd.f32 %v723, %v750
        %752 = vmatmul.f32.gmra.mxu0 %v660
        %v753 = vpop.f32.mrf.mxu0
        %v754 = vadd.f32 %v723, %v753
        %755 = vmatmul.f32.gmra.mxu0 %v661
        %v756 = vpop.f32.mrf.mxu0
        %v757 = vadd.f32 %v723, %v756
        %758 = vmatmul.f32.gmra.mxu0 %v662
        %v759 = vpop.f32.mrf.mxu0
        %v760 = vadd.f32 %v723, %v759
        %761 = vmatmul.f32.gmra.mxu0 %v663
        %v762 = vpop.f32.mrf.mxu0
        %v763 = vadd.f32 %v723, %v762
        %764 = vmatmul.f32.gmra.mxu0 %v664
        %v765 = vpop.f32.mrf.mxu0
        %v766 = vadd.f32 %v723, %v765
        %767 = vmatmul.f32.gmra.mxu0 %v665
        %v768 = vpop.f32.mrf.mxu0
        %v769 = vadd.f32 %v723, %v768
        %770 = vmatmul.f32.gmra.mxu0 %v666
        %v771 = vpop.f32.mrf.mxu0
        %v772 = vadd.f32 %v723, %v771
        %773 = vmatmul.f32.gmra.mxu0 %v667
        %v774 = vpop.f32.mrf.mxu0
        %v775 = vadd.f32 %v723, %v774
        %776 = vmatmul.f32.gmra.mxu0 %v668
        %v777 = vpop.f32.mrf.mxu0
        %v778 = vadd.f32 %v723, %v777
        %779 = vmatmul.f32.gmra.mxu0 %v669
        %v780 = vpop.f32.mrf.mxu0
        %v781 = vadd.f32 %v723, %v780
        %782 = vmatmul.f32.gmra.mxu0 %v670
        %v783 = vpop.f32.mrf.mxu0
        %v784 = vadd.f32 %v723, %v783
        %785 = vmatmul.f32.gmra.mxu0 %v671
        %v786 = vpop.f32.mrf.mxu0
        %v787 = vadd.f32 %v723, %v786
        %788 = vmatmul.f32.gmra.mxu0 %v672
        %v789 = vpop.f32.mrf.mxu0
        %v790 = vadd.f32 %v723, %v789
        %791 = vmatmul.f32.gmra.mxu0 %v673
        %v792 = vpop.f32.mrf.mxu0
        %v793 = vadd.f32 %v723, %v792
        %794 = vmatmul.f32.gmra.mxu0 %v674
        %v795 = vpop.f32.mrf.mxu0
        %v796 = vadd.f32 %v723, %v795
        %797 = vmatmul.f32.gmra.mxu0 %v675
        %v798 = vpop.f32.mrf.mxu0
        %v799 = vadd.f32 %v723, %v798
        %800 = vmatmul.f32.gmra.mxu0 %v676
        %v801 = vpop.f32.mrf.mxu0
        %v802 = vadd.f32 %v723, %v801
        %803 = vmatmul.f32.gmra.mxu0 %v677
        %v804 = vpop.f32.mrf.mxu0
        %v805 = vadd.f32 %v723, %v804
        %806 = vmatmul.f32.gmra.mxu0 %v678
        %v807 = vpop.f32.mrf.mxu0
        %v808 = vadd.f32 %v723, %v807
        %809 = vmatmul.f32.gmra.mxu0 %v679
        %v810 = vpop.f32.mrf.mxu0
        %v811 = vadd.f32 %v723, %v810
        %812 = vmatmul.f32.gmra.mxu0 %v680
        %v813 = vpop.f32.mrf.mxu0
        %v814 = vadd.f32 %v723, %v813
        %815 = vmatmul.f32.gmra.mxu0 %v681
        %v816 = vpop.f32.mrf.mxu0
        %v817 = vadd.f32 %v723, %v816
        %818 = vmatmul.f32.gmra.mxu0 %v682
        %v819 = vpop.f32.mrf.mxu0
        %v820 = vadd.f32 %v723, %v819
        %821 = vmatmul.f32.gmra.mxu0 %v683
        %v822 = vpop.f32.mrf.mxu0
        %v823 = vadd.f32 %v723, %v822
        %824 = vmatmul.f32.gmra.mxu0 %v684
        %v825 = vpop.f32.mrf.mxu0
        %v826 = vadd.f32 %v723, %v825
        %827 = vmatmul.f32.gmra.mxu0 %v685
        %v828 = vpop.f32.mrf.mxu0
        %v829 = vadd.f32 %v723, %v828
        %830 = vmatmul.f32.gmra.mxu0 %v686
        %v831 = vpop.f32.mrf.mxu0
        %v832 = vadd.f32 %v723, %v831
        %833 = vmatmul.f32.gmra.mxu0 %v687
        %v834 = vpop.f32.mrf.mxu0
        %v835 = vadd.f32 %v723, %v834
        %836 = vmatmul.f32.gmra.mxu0 %v688
        %v837 = vpop.f32.mrf.mxu0
        %v838 = vadd.f32 %v723, %v837
        %839 = vdwg.mxu0
        %840 = vmatpush.msra.mxu0 %v720
        %841 = vmatpush.msra.mxu0 %v718
        %842 = vmatpush.msra.mxu0 %v716
        %843 = vmatpush.msra.mxu0 %v714
        %844 = vmatpush.msra.mxu0 %v712
        %845 = vmatpush.msra.mxu0 %v710
        %846 = vmatpush.msra.mxu0 %v708
        %847 = vmatpush.msra.mxu0 %v706
        %848 = vmatpush.msra.mxu0 %v704
        %849 = vmatpush.msra.mxu0 %v702
        %850 = vmatpush.msra.mxu0 %v700
        %851 = vmatpush.msra.mxu0 %v698
        %852 = vmatpush.msra.mxu0 %v696
        %853 = vmatpush.msra.mxu0 %v694
        %854 = vmatpush.msra.mxu0 %v692
        %855 = vmatpush.msra.mxu0 %v690
        %856 = vmatmul.f32.gmra.mxu0 %v657
        %v857 = vpop.f32.mrf.mxu0
        %v858 = vadd.f32 %v724, %v857
        %859 = vmatmul.f32.gmra.mxu0 %v658
        %v860 = vpop.f32.mrf.mxu0
        %v861 = vadd.f32 %v724, %v860
        %862 = vmatmul.f32.gmra.mxu0 %v659
        %v863 = vpop.f32.mrf.mxu0
        %v864 = vadd.f32 %v724, %v863
        %865 = vmatmul.f32.gmra.mxu0 %v660
        %v866 = vpop.f32.mrf.mxu0
        %v867 = vadd.f32 %v724, %v866
        %868 = vmatmul.f32.gmra.mxu0 %v661
        %v869 = vpop.f32.mrf.mxu0
        %v870 = vadd.f32 %v724, %v869
        %871 = vmatmul.f32.gmra.mxu0 %v662
        %v872 = vpop.f32.mrf.mxu0
        %v873 = vadd.f32 %v724, %v872
        %874 = vmatmul.f32.gmra.mxu0 %v663
        %v875 = vpop.f32.mrf.mxu0
        %v876 = vadd.f32 %v724, %v875
        %877 = vmatmul.f32.gmra.mxu0 %v664
        %v878 = vpop.f32.mrf.mxu0
        %v879 = vadd.f32 %v724, %v878
        %880 = vmatmul.f32.gmra.mxu0 %v665
        %v881 = vpop.f32.mrf.mxu0
        %v882 = vadd.f32 %v724, %v881
        %883 = vmatmul.f32.gmra.mxu0 %v666
        %v884 = vpop.f32.mrf.mxu0
        %v885 = vadd.f32 %v724, %v884
        %886 = vmatmul.f32.gmra.mxu0 %v667
        %v887 = vpop.f32.mrf.mxu0
        %v888 = vadd.f32 %v724, %v887
        %889 = vmatmul.f32.gmra.mxu0 %v668
        %v890 = vpop.f32.mrf.mxu0
        %v891 = vadd.f32 %v724, %v890
        %892 = vmatmul.f32.gmra.mxu0 %v669
        %v893 = vpop.f32.mrf.mxu0
        %v894 = vadd.f32 %v724, %v893
        %895 = vmatmul.f32.gmra.mxu0 %v670
        %v896 = vpop.f32.mrf.mxu0
        %v897 = vadd.f32 %v724, %v896
        %898 = vmatmul.f32.gmra.mxu0 %v671
        %v899 = vpop.f32.mrf.mxu0
        %v900 = vadd.f32 %v724, %v899
        %901 = vmatmul.f32.gmra.mxu0 %v672
        %v902 = vpop.f32.mrf.mxu0
        %v903 = vadd.f32 %v724, %v902
        %904 = vmatmul.f32.gmra.mxu0 %v673
        %v905 = vpop.f32.mrf.mxu0
        %v906 = vadd.f32 %v724, %v905
        %907 = vmatmul.f32.gmra.mxu0 %v674
        %v908 = vpop.f32.mrf.mxu0
        %v909 = vadd.f32 %v724, %v908
        %910 = vmatmul.f32.gmra.mxu0 %v675
        %v911 = vpop.f32.mrf.mxu0
        %v912 = vadd.f32 %v724, %v911
        %913 = vmatmul.f32.gmra.mxu0 %v676
        %v914 = vpop.f32.mrf.mxu0
        %v915 = vadd.f32 %v724, %v914
        %916 = vmatmul.f32.gmra.mxu0 %v677
        %v917 = vpop.f32.mrf.mxu0
        %v918 = vadd.f32 %v724, %v917
        %919 = vmatmul.f32.gmra.mxu0 %v678
        %v920 = vpop.f32.mrf.mxu0
        %v921 = vadd.f32 %v724, %v920
        %922 = vmatmul.f32.gmra.mxu0 %v679
        %v923 = vpop.f32.mrf.mxu0
        %v924 = vadd.f32 %v724, %v923
        %925 = vmatmul.f32.gmra.mxu0 %v680
        %v926 = vpop.f32.mrf.mxu0
        %v927 = vadd.f32 %v724, %v926
        %928 = vmatmul.f32.gmra.mxu0 %v681
        %v929 = vpop.f32.mrf.mxu0
        %v930 = vadd.f32 %v724, %v929
        %931 = vmatmul.f32.gmra.mxu0 %v682
        %v932 = vpop.f32.mrf.mxu0
        %v933 = vadd.f32 %v724, %v932
        %934 = vmatmul.f32.gmra.mxu0 %v683
        %v935 = vpop.f32.mrf.mxu0
        %v936 = vadd.f32 %v724, %v935
        %937 = vmatmul.f32.gmra.mxu0 %v684
        %v938 = vpop.f32.mrf.mxu0
        %v939 = vadd.f32 %v724, %v938
        %940 = vmatmul.f32.gmra.mxu0 %v685
        %v941 = vpop.f32.mrf.mxu0
        %v942 = vadd.f32 %v724, %v941
        %943 = vmatmul.f32.gmra.mxu0 %v686
        %v944 = vpop.f32.mrf.mxu0
        %v945 = vadd.f32 %v724, %v944
        %946 = vmatmul.f32.gmra.mxu0 %v687
        %v947 = vpop.f32.mrf.mxu0
        %v948 = vadd.f32 %v724, %v947
        %949 = vmatmul.f32.gmra.mxu0 %v688
        %v950 = vpop.f32.mrf.mxu0
        %v951 = vadd.f32 %v724, %v950
        %952 = vdwg.mxu0
        %v953 = vmax.f32 %v745, 0.0
        %v954 = vmax.f32 %v858, 0.0
        %v955 = vmax.f32 %v748, 0.0
        %v956 = vmax.f32 %v861, 0.0
        %v957 = vmax.f32 %v751, 0.0
        %v958 = vmax.f32 %v864, 0.0
        %v959 = vmax.f32 %v754, 0.0
        %v960 = vmax.f32 %v867, 0.0
        %v961 = vmax.f32 %v757, 0.0
        %v962 = vmax.f32 %v870, 0.0
        %v963 = vmax.f32 %v760, 0.0
        %v964 = vmax.f32 %v873, 0.0
        %v965 = vmax.f32 %v763, 0.0
        %v966 = vmax.f32 %v876, 0.0
        %v967 = vmax.f32 %v766, 0.0
        %v968 = vmax.f32 %v879, 0.0
        %v969 = vmax.f32 %v769, 0.0
        %v970 = vmax.f32 %v882, 0.0
        %v971 = vmax.f32 %v772, 0.0
        %v972 = vmax.f32 %v885, 0.0
        %v973 = vmax.f32 %v775, 0.0
        %v974 = vmax.f32 %v888, 0.0
        %v975 = vmax.f32 %v778, 0.0
        %v976 = vmax.f32 %v891, 0.0
        %v977 = vmax.f32 %v781, 0.0
        %v978 = vmax.f32 %v894, 0.0
        %v979 = vmax.f32 %v784, 0.0
        %v980 = vmax.f32 %v897, 0.0
        %v981 = vmax.f32 %v787, 0.0
        %v982 = vmax.f32 %v900, 0.0
        %v983 = vmax.f32 %v790, 0.0
        %v984 = vmax.f32 %v903, 0.0
        %v985 = vmax.f32 %v793, 0.0
        %v986 = vmax.f32 %v906, 0.0
        %v987 = vmax.f32 %v796, 0.0
        %v988 = vmax.f32 %v909, 0.0
        %v989 = vmax.f32 %v799, 0.0
        %v990 = vmax.f32 %v912, 0.0
        %v991 = vmax.f32 %v802, 0.0
        %v992 = vmax.f32 %v915, 0.0
        %v993 = vmax.f32 %v805, 0.0
        %v994 = vmax.f32 %v918, 0.0
        %v995 = vmax.f32 %v808, 0.0
        %v996 = vmax.f32 %v921, 0.0
        %v997 = vmax.f32 %v811, 0.0
        %v998 = vmax.f32 %v924, 0.0
        %v999 = vmax.f32 %v814, 0.0
        %v1000 = vmax.f32 %v927, 0.0
        %v1001 = vmax.f32 %v817, 0.0
        %v1002 = vmax.f32 %v930, 0.0
        %v1003 = vmax.f32 %v820, 0.0
        %v1004 = vmax.f32 %v933, 0.0
        %v1005 = vmax.f32 %v823, 0.0
        %v1006 = vmax.f32 %v936, 0.0
        %v1007 = vmax.f32 %v826, 0.0
        %v1008 = vmax.f32 %v939, 0.0
        %v1009 = vmax.f32 %v829, 0.0
        %v1010 = vmax.f32 %v942, 0.0
        %v1011 = vmax.f32 %v832, 0.0
        %v1012 = vmax.f32 %v945, 0.0
        %v1013 = vmax.f32 %v835, 0.0
        %v1014 = vmax.f32 %v948, 0.0
        %v1015 = vmax.f32 %v838, 0.0
        %v1016 = vmax.f32 %v951, 0.0
        %v1017 = vld [vmem:[%s5] sm:$0xff]
        %v1018 = vld [vmem:[%s5 + $0x8] sm:$0xff]
        %v1019 = vld [vmem:[%s5 + $0x10] sm:$0xff]
        %v1020 = vld [vmem:[%s5 + $0x18] sm:$0xff]
        %v1021 = vld [vmem:[%s5 + $0x20] sm:$0xff]
        %v1022 = vld [vmem:[%s5 + $0x28] sm:$0xff]
        %v1023 = vld [vmem:[%s5 + $0x30] sm:$0xff]
        %v1024 = vld [vmem:[%s5 + $0x38] sm:$0xff]
        %v1025 = vld [vmem:[%s5 + $0x40] sm:$0xff]
        %v1026 = vld [vmem:[%s5 + $0x48] sm:$0xff]
        %v1027 = vld [vmem:[%s5 + $0x50] sm:$0xff]
        %v1028 = vld [vmem:[%s5 + $0x58] sm:$0xff]
        %v1029 = vld [vmem:[%s5 + $0x60] sm:$0xff]
        %v1030 = vld [vmem:[%s5 + $0x68] sm:$0xff]
        %v1031 = vld [vmem:[%s5 + $0x70] sm:$0xff]
        %v1032 = vld [vmem:[%s5 + $0x78] sm:$0xff]
        %v1033 = vld [vmem:[%s5 + $0x80] sm:$0xff]
        %v1034 = vld [vmem:[%s5 + $0x88] sm:$0xff]
        %v1035 = vld [vmem:[%s5 + $0x90] sm:$0xff]
        %v1036 = vld [vmem:[%s5 + $0x98] sm:$0xff]
        %v1037 = vld [vmem:[%s5 + $0xa0] sm:$0xff]
        %v1038 = vld [vmem:[%s5 + $0xa8] sm:$0xff]
        %v1039 = vld [vmem:[%s5 + $0xb0] sm:$0xff]
        %v1040 = vld [vmem:[%s5 + $0xb8] sm:$0xff]
        %v1041 = vld [vmem:[%s5 + $0xc0] sm:$0xff]
        %v1042 = vld [vmem:[%s5 + $0xc8] sm:$0xff]
        %v1043 = vld [vmem:[%s5 + $0xd0] sm:$0xff]
        %v1044 = vld [vmem:[%s5 + $0xd8] sm:$0xff]
        %v1045 = vld [vmem:[%s5 + $0xe0] sm:$0xff]
        %v1046 = vld [vmem:[%s5 + $0xe8] sm:$0xff]
        %v1047 = vld [vmem:[%s5 + $0xf0] sm:$0xff]
        %v1048 = vld [vmem:[%s5 + $0xf8] sm:$0xff]
        %v1049 = vld [vmem:[%s5 + $0x100] sm:$0xff]
        %v1050 = vld [vmem:[%s5 + $0x108] sm:$0xff]
        %v1051 = vld [vmem:[%s5 + $0x110] sm:$0xff]
        %v1052 = vld [vmem:[%s5 + $0x118] sm:$0xff]
        %v1053 = vld [vmem:[%s5 + $0x120] sm:$0xff]
        %v1054 = vld [vmem:[%s5 + $0x128] sm:$0xff]
        %v1055 = vld [vmem:[%s5 + $0x130] sm:$0xff]
        %v1056 = vld [vmem:[%s5 + $0x138] sm:$0xff]
        %v1057 = vld [vmem:[%s5 + $0x140] sm:$0xff]
        %v1058 = vld [vmem:[%s5 + $0x148] sm:$0xff]
        %v1059 = vld [vmem:[%s5 + $0x150] sm:$0xff]
        %v1060 = vld [vmem:[%s5 + $0x158] sm:$0xff]
        %v1061 = vld [vmem:[%s5 + $0x160] sm:$0xff]
        %v1062 = vld [vmem:[%s5 + $0x168] sm:$0xff]
        %v1063 = vld [vmem:[%s5 + $0x170] sm:$0xff]
        %v1064 = vld [vmem:[%s5 + $0x178] sm:$0xff]
        %v1065 = vld [vmem:[%s5 + $0x180] sm:$0xff]
        %v1066 = vld [vmem:[%s5 + $0x188] sm:$0xff]
        %v1067 = vld [vmem:[%s5 + $0x190] sm:$0xff]
        %v1068 = vld [vmem:[%s5 + $0x198] sm:$0xff]
        %v1069 = vld [vmem:[%s5 + $0x1a0] sm:$0xff]
        %v1070 = vld [vmem:[%s5 + $0x1a8] sm:$0xff]
        %v1071 = vld [vmem:[%s5 + $0x1b0] sm:$0xff]
        %v1072 = vld [vmem:[%s5 + $0x1b8] sm:$0xff]
        %v1073 = vld [vmem:[%s5 + $0x1c0] sm:$0xff]
        %v1074 = vld [vmem:[%s5 + $0x1c8] sm:$0xff]
        %v1075 = vld [vmem:[%s5 + $0x1d0] sm:$0xff]
        %v1076 = vld [vmem:[%s5 + $0x1d8] sm:$0xff]
        %v1077 = vld [vmem:[%s5 + $0x1e0] sm:$0xff]
        %v1078 = vld [vmem:[%s5 + $0x1e8] sm:$0xff]
        %v1079 = vld [vmem:[%s5 + $0x1f0] sm:$0xff]
        %v1080 = vld [vmem:[%s5 + $0x1f8] sm:$0xff]
        %v1081 = vld [vmem:[%s6] sm:$0x3]
        %v1083 = vperm.slane %v1081, 0
        %v1084 = vperm.slane %v1081, 1
        %1087 = vmatpush.msra.mxu0 %v1047
        %1088 = vmatpush.msra.mxu0 %v1045
        %1089 = vmatpush.msra.mxu0 %v1043
        %1090 = vmatpush.msra.mxu0 %v1041
        %1091 = vmatpush.msra.mxu0 %v1039
        %1092 = vmatpush.msra.mxu0 %v1037
        %1093 = vmatpush.msra.mxu0 %v1035
        %1094 = vmatpush.msra.mxu0 %v1033
        %1095 = vmatpush.msra.mxu0 %v1031
        %1096 = vmatpush.msra.mxu0 %v1029
        %1097 = vmatpush.msra.mxu0 %v1027
        %1098 = vmatpush.msra.mxu0 %v1025
        %1099 = vmatpush.msra.mxu0 %v1023
        %1100 = vmatpush.msra.mxu0 %v1021
        %1101 = vmatpush.msra.mxu0 %v1019
        %1102 = vmatpush.msra.mxu0 %v1017
        %1103 = vmatmul.f32.gmra.mxu0 %v953
        %v1104 = vpop.f32.mrf.mxu0
        %v1105 = vadd.f32 %v1083, %v1104
        %1106 = vmatmul.f32.gmra.mxu0 %v955
        %v1107 = vpop.f32.mrf.mxu0
        %v1108 = vadd.f32 %v1083, %v1107
        %1109 = vmatmul.f32.gmra.mxu0 %v957
        %v1110 = vpop.f32.mrf.mxu0
        %v1111 = vadd.f32 %v1083, %v1110
        %1112 = vmatmul.f32.gmra.mxu0 %v959
        %v1113 = vpop.f32.mrf.mxu0
        %v1114 = vadd.f32 %v1083, %v1113
        %1115 = vmatmul.f32.gmra.mxu0 %v961
        %v1116 = vpop.f32.mrf.mxu0
        %v1117 = vadd.f32 %v1083, %v1116
        %1118 = vmatmul.f32.gmra.mxu0 %v963
        %v1119 = vpop.f32.mrf.mxu0
        %v1120 = vadd.f32 %v1083, %v1119
        %1121 = vmatmul.f32.gmra.mxu0 %v965
        %v1122 = vpop.f32.mrf.mxu0
        %v1123 = vadd.f32 %v1083, %v1122
        %1124 = vmatmul.f32.gmra.mxu0 %v967
        %v1125 = vpop.f32.mrf.mxu0
        %v1126 = vadd.f32 %v1083, %v1125
        %1127 = vmatmul.f32.gmra.mxu0 %v969
        %v1128 = vpop.f32.mrf.mxu0
        %v1129 = vadd.f32 %v1083, %v1128
        %1130 = vmatmul.f32.gmra.mxu0 %v971
        %v1131 = vpop.f32.mrf.mxu0
        %v1132 = vadd.f32 %v1083, %v1131
        %1133 = vmatmul.f32.gmra.mxu0 %v973
        %v1134 = vpop.f32.mrf.mxu0
        %v1135 = vadd.f32 %v1083, %v1134
        %1136 = vmatmul.f32.gmra.mxu0 %v975
        %v1137 = vpop.f32.mrf.mxu0
        %v1138 = vadd.f32 %v1083, %v1137
        %1139 = vmatmul.f32.gmra.mxu0 %v977
        %v1140 = vpop.f32.mrf.mxu0
        %v1141 = vadd.f32 %v1083, %v1140
        %1142 = vmatmul.f32.gmra.mxu0 %v979
        %v1143 = vpop.f32.mrf.mxu0
        %v1144 = vadd.f32 %v1083, %v1143
        %1145 = vmatmul.f32.gmra.mxu0 %v981
        %v1146 = vpop.f32.mrf.mxu0
        %v1147 = vadd.f32 %v1083, %v1146
        %1148 = vmatmul.f32.gmra.mxu0 %v983
        %v1149 = vpop.f32.mrf.mxu0
        %v1150 = vadd.f32 %v1083, %v1149
        %1151 = vmatmul.f32.gmra.mxu0 %v985
        %v1152 = vpop.f32.mrf.mxu0
        %v1153 = vadd.f32 %v1083, %v1152
        %1154 = vmatmul.f32.gmra.mxu0 %v987
        %v1155 = vpop.f32.mrf.mxu0
        %v1156 = vadd.f32 %v1083, %v1155
        %1157 = vmatmul.f32.gmra.mxu0 %v989
        %v1158 = vpop.f32.mrf.mxu0
        %v1159 = vadd.f32 %v1083, %v1158
        %1160 = vmatmul.f32.gmra.mxu0 %v991
        %v1161 = vpop.f32.mrf.mxu0
        %v1162 = vadd.f32 %v1083, %v1161
        %1163 = vmatmul.f32.gmra.mxu0 %v993
        %v1164 = vpop.f32.mrf.mxu0
        %v1165 = vadd.f32 %v1083, %v1164
        %1166 = vmatmul.f32.gmra.mxu0 %v995
        %v1167 = vpop.f32.mrf.mxu0
        %v1168 = vadd.f32 %v1083, %v1167
        %1169 = vmatmul.f32.gmra.mxu0 %v997
        %v1170 = vpop.f32.mrf.mxu0
        %v1171 = vadd.f32 %v1083, %v1170
        %1172 = vmatmul.f32.gmra.mxu0 %v999
        %v1173 = vpop.f32.mrf.mxu0
        %v1174 = vadd.f32 %v1083, %v1173
        %1175 = vmatmul.f32.gmra.mxu0 %v1001
        %v1176 = vpop.f32.mrf.mxu0
        %v1177 = vadd.f32 %v1083, %v1176
        %1178 = vmatmul.f32.gmra.mxu0 %v1003
        %v1179 = vpop.f32.mrf.mxu0
        %v1180 = vadd.f32 %v1083, %v1179
        %1181 = vmatmul.f32.gmra.mxu0 %v1005
        %v1182 = vpop.f32.mrf.mxu0
        %v1183 = vadd.f32 %v1083, %v1182
        %1184 = vmatmul.f32.gmra.mxu0 %v1007
        %v1185 = vpop.f32.mrf.mxu0
        %v1186 = vadd.f32 %v1083, %v1185
        %1187 = vmatmul.f32.gmra.mxu0 %v1009
        %v1188 = vpop.f32.mrf.mxu0
        %v1189 = vadd.f32 %v1083, %v1188
        %1190 = vmatmul.f32.gmra.mxu0 %v1011
        %v1191 = vpop.f32.mrf.mxu0
        %v1192 = vadd.f32 %v1083, %v1191
        %1193 = vmatmul.f32.gmra.mxu0 %v1013
        %v1194 = vpop.f32.mrf.mxu0
        %v1195 = vadd.f32 %v1083, %v1194
        %1196 = vmatmul.f32.gmra.mxu0 %v1015
        %v1197 = vpop.f32.mrf.mxu0
        %v1198 = vadd.f32 %v1083, %v1197
        %1199 = vdwg.mxu0
        %1200 = vmatpush.msra.mxu0 %v1079
        %1201 = vmatpush.msra.mxu0 %v1077
        %1202 = vmatpush.msra.mxu0 %v1075
        %1203 = vmatpush.msra.mxu0 %v1073
        %1204 = vmatpush.msra.mxu0 %v1071
        %1205 = vmatpush.msra.mxu0 %v1069
        %1206 = vmatpush.msra.mxu0 %v1067
        %1207 = vmatpush.msra.mxu0 %v1065
        %1208 = vmatpush.msra.mxu0 %v1063
        %1209 = vmatpush.msra.mxu0 %v1061
        %1210 = vmatpush.msra.mxu0 %v1059
        %1211 = vmatpush.msra.mxu0 %v1057
        %1212 = vmatpush.msra.mxu0 %v1055
        %1213 = vmatpush.msra.mxu0 %v1053
        %1214 = vmatpush.msra.mxu0 %v1051
        %1215 = vmatpush.msra.mxu0 %v1049
        %1216 = vmatmul.f32.gmra.mxu0 %v954
        %v1217 = vpop.f32.mrf.mxu0
        %v1218 = vadd.f32 %v1105, %v1217
        %1219 = vmatmul.f32.gmra.mxu0 %v956
        %v1220 = vpop.f32.mrf.mxu0
        %v1221 = vadd.f32 %v1108, %v1220
        %1222 = vmatmul.f32.gmra.mxu0 %v958
        %v1223 = vpop.f32.mrf.mxu0
        %v1224 = vadd.f32 %v1111, %v1223
        %1225 = vmatmul.f32.gmra.mxu0 %v960
        %v1226 = vpop.f32.mrf.mxu0
        %v1227 = vadd.f32 %v1114, %v1226
        %1228 = vmatmul.f32.gmra.mxu0 %v962
        %v1229 = vpop.f32.mrf.mxu0
        %v1230 = vadd.f32 %v1117, %v1229
        %1231 = vmatmul.f32.gmra.mxu0 %v964
        %v1232 = vpop.f32.mrf.mxu0
        %v1233 = vadd.f32 %v1120, %v1232
        %1234 = vmatmul.f32.gmra.mxu0 %v966
        %v1235 = vpop.f32.mrf.mxu0
        %v1236 = vadd.f32 %v1123, %v1235
        %1237 = vmatmul.f32.gmra.mxu0 %v968
        %v1238 = vpop.f32.mrf.mxu0
        %v1239 = vadd.f32 %v1126, %v1238
        %1240 = vmatmul.f32.gmra.mxu0 %v970
        %v1241 = vpop.f32.mrf.mxu0
        %v1242 = vadd.f32 %v1129, %v1241
        %1243 = vmatmul.f32.gmra.mxu0 %v972
        %v1244 = vpop.f32.mrf.mxu0
        %v1245 = vadd.f32 %v1132, %v1244
        %1246 = vmatmul.f32.gmra.mxu0 %v974
        %v1247 = vpop.f32.mrf.mxu0
        %v1248 = vadd.f32 %v1135, %v1247
        %1249 = vmatmul.f32.gmra.mxu0 %v976
        %v1250 = vpop.f32.mrf.mxu0
        %v1251 = vadd.f32 %v1138, %v1250
        %1252 = vmatmul.f32.gmra.mxu0 %v978
        %v1253 = vpop.f32.mrf.mxu0
        %v1254 = vadd.f32 %v1141, %v1253
        %1255 = vmatmul.f32.gmra.mxu0 %v980
        %v1256 = vpop.f32.mrf.mxu0
        %v1257 = vadd.f32 %v1144, %v1256
        %1258 = vmatmul.f32.gmra.mxu0 %v982
        %v1259 = vpop.f32.mrf.mxu0
        %v1260 = vadd.f32 %v1147, %v1259
        %1261 = vmatmul.f32.gmra.mxu0 %v984
        %v1262 = vpop.f32.mrf.mxu0
        %v1263 = vadd.f32 %v1150, %v1262
        %1264 = vmatmul.f32.gmra.mxu0 %v986
        %v1265 = vpop.f32.mrf.mxu0
        %v1266 = vadd.f32 %v1153, %v1265
        %1267 = vmatmul.f32.gmra.mxu0 %v988
        %v1268 = vpop.f32.mrf.mxu0
        %v1269 = vadd.f32 %v1156, %v1268
        %1270 = vmatmul.f32.gmra.mxu0 %v990
        %v1271 = vpop.f32.mrf.mxu0
        %v1272 = vadd.f32 %v1159, %v1271
        %1273 = vmatmul.f32.gmra.mxu0 %v992
        %v1274 = vpop.f32.mrf.mxu0
        %v1275 = vadd.f32 %v1162, %v1274
        %1276 = vmatmul.f32.gmra.mxu0 %v994
        %v1277 = vpop.f32.mrf.mxu0
        %v1278 = vadd.f32 %v1165, %v1277
        %1279 = vmatmul.f32.gmra.mxu0 %v996
        %v1280 = vpop.f32.mrf.mxu0
        %v1281 = vadd.f32 %v1168, %v1280
        %1282 = vmatmul.f32.gmra.mxu0 %v998
        %v1283 = vpop.f32.mrf.mxu0
        %v1284 = vadd.f32 %v1171, %v1283
        %1285 = vmatmul.f32.gmra.mxu0 %v1000
        %v1286 = vpop.f32.mrf.mxu0
        %v1287 = vadd.f32 %v1174, %v1286
        %1288 = vmatmul.f32.gmra.mxu0 %v1002
        %v1289 = vpop.f32.mrf.mxu0
        %v1290 = vadd.f32 %v1177, %v1289
        %1291 = vmatmul.f32.gmra.mxu0 %v1004
        %v1292 = vpop.f32.mrf.mxu0
        %v1293 = vadd.f32 %v1180, %v1292
        %1294 = vmatmul.f32.gmra.mxu0 %v1006
        %v1295 = vpop.f32.mrf.mxu0
        %v1296 = vadd.f32 %v1183, %v1295
        %1297 = vmatmul.f32.gmra.mxu0 %v1008
        %v1298 = vpop.f32.mrf.mxu0
        %v1299 = vadd.f32 %v1186, %v1298
        %1300 = vmatmul.f32.gmra.mxu0 %v1010
        %v1301 = vpop.f32.mrf.mxu0
        %v1302 = vadd.f32 %v1189, %v1301
        %1303 = vmatmul.f32.gmra.mxu0 %v1012
        %v1304 = vpop.f32.mrf.mxu0
        %v1305 = vadd.f32 %v1192, %v1304
        %1306 = vmatmul.f32.gmra.mxu0 %v1014
        %v1307 = vpop.f32.mrf.mxu0
        %v1308 = vadd.f32 %v1195, %v1307
        %1309 = vmatmul.f32.gmra.mxu0 %v1016
        %v1310 = vpop.f32.mrf.mxu0
        %v1311 = vadd.f32 %v1198, %v1310
        %1312 = vdwg.mxu0
        %1313 = vmatpush.msra.mxu0 %v1048
        %1314 = vmatpush.msra.mxu0 %v1046
        %1315 = vmatpush.msra.mxu0 %v1044
        %1316 = vmatpush.msra.mxu0 %v1042
        %1317 = vmatpush.msra.mxu0 %v1040
        %1318 = vmatpush.msra.mxu0 %v1038
        %1319 = vmatpush.msra.mxu0 %v1036
        %1320 = vmatpush.msra.mxu0 %v1034
        %1321 = vmatpush.msra.mxu0 %v1032
        %1322 = vmatpush.msra.mxu0 %v1030
        %1323 = vmatpush.msra.mxu0 %v1028
        %1324 = vmatpush.msra.mxu0 %v1026
        %1325 = vmatpush.msra.mxu0 %v1024
        %1326 = vmatpush.msra.mxu0 %v1022
        %1327 = vmatpush.msra.mxu0 %v1020
        %1328 = vmatpush.msra.mxu0 %v1018
        %1329 = vmatmul.f32.gmra.mxu0 %v953
        %v1330 = vpop.f32.mrf.mxu0
        %v1331 = vadd.f32 %v1084, %v1330
        %1332 = vmatmul.f32.gmra.mxu0 %v955
        %v1333 = vpop.f32.mrf.mxu0
        %v1334 = vadd.f32 %v1084, %v1333
        %1335 = vmatmul.f32.gmra.mxu0 %v957
        %v1336 = vpop.f32.mrf.mxu0
        %v1337 = vadd.f32 %v1084, %v1336
        %1338 = vmatmul.f32.gmra.mxu0 %v959
        %v1339 = vpop.f32.mrf.mxu0
        %v1340 = vadd.f32 %v1084, %v1339
        %1341 = vmatmul.f32.gmra.mxu0 %v961
        %v1342 = vpop.f32.mrf.mxu0
        %v1343 = vadd.f32 %v1084, %v1342
        %1344 = vmatmul.f32.gmra.mxu0 %v963
        %v1345 = vpop.f32.mrf.mxu0
        %v1346 = vadd.f32 %v1084, %v1345
        %1347 = vmatmul.f32.gmra.mxu0 %v965
        %v1348 = vpop.f32.mrf.mxu0
        %v1349 = vadd.f32 %v1084, %v1348
        %1350 = vmatmul.f32.gmra.mxu0 %v967
        %v1351 = vpop.f32.mrf.mxu0
        %v1352 = vadd.f32 %v1084, %v1351
        %1353 = vmatmul.f32.gmra.mxu0 %v969
        %v1354 = vpop.f32.mrf.mxu0
        %v1355 = vadd.f32 %v1084, %v1354
        %1356 = vmatmul.f32.gmra.mxu0 %v971
        %v1357 = vpop.f32.mrf.mxu0
        %v1358 = vadd.f32 %v1084, %v1357
        %1359 = vmatmul.f32.gmra.mxu0 %v973
        %v1360 = vpop.f32.mrf.mxu0
        %v1361 = vadd.f32 %v1084, %v1360
        %1362 = vmatmul.f32.gmra.mxu0 %v975
        %v1363 = vpop.f32.mrf.mxu0
        %v1364 = vadd.f32 %v1084, %v1363
        %1365 = vmatmul.f32.gmra.mxu0 %v977
        %v1366 = vpop.f32.mrf.mxu0
        %v1367 = vadd.f32 %v1084, %v1366
        %1368 = vmatmul.f32.gmra.mxu0 %v979
        %v1369 = vpop.f32.mrf.mxu0
        %v1370 = vadd.f32 %v1084, %v1369
        %1371 = vmatmul.f32.gmra.mxu0 %v981
        %v1372 = vpop.f32.mrf.mxu0
        %v1373 = vadd.f32 %v1084, %v1372
        %1374 = vmatmul.f32.gmra.mxu0 %v983
        %v1375 = vpop.f32.mrf.mxu0
        %v1376 = vadd.f32 %v1084, %v1375
        %1377 = vmatmul.f32.gmra.mxu0 %v985
        %v1378 = vpop.f32.mrf.mxu0
        %v1379 = vadd.f32 %v1084, %v1378
        %1380 = vmatmul.f32.gmra.mxu0 %v987
        %v1381 = vpop.f32.mrf.mxu0
        %v1382 = vadd.f32 %v1084, %v1381
        %1383 = vmatmul.f32.gmra.mxu0 %v989
        %v1384 = vpop.f32.mrf.mxu0
        %v1385 = vadd.f32 %v1084, %v1384
        %1386 = vmatmul.f32.gmra.mxu0 %v991
        %v1387 = vpop.f32.mrf.mxu0
        %v1388 = vadd.f32 %v1084, %v1387
        %1389 = vmatmul.f32.gmra.mxu0 %v993
        %v1390 = vpop.f32.mrf.mxu0
        %v1391 = vadd.f32 %v1084, %v1390
        %1392 = vmatmul.f32.gmra.mxu0 %v995
        %v1393 = vpop.f32.mrf.mxu0
        %v1394 = vadd.f32 %v1084, %v1393
        %1395 = vmatmul.f32.gmra.mxu0 %v997
        %v1396 = vpop.f32.mrf.mxu0
        %v1397 = vadd.f32 %v1084, %v1396
        %1398 = vmatmul.f32.gmra.mxu0 %v999
        %v1399 = vpop.f32.mrf.mxu0
        %v1400 = vadd.f32 %v1084, %v1399
        %1401 = vmatmul.f32.gmra.mxu0 %v1001
        %v1402 = vpop.f32.mrf.mxu0
        %v1403 = vadd.f32 %v1084, %v1402
        %1404 = vmatmul.f32.gmra.mxu0 %v1003
        %v1405 = vpop.f32.mrf.mxu0
        %v1406 = vadd.f32 %v1084, %v1405
        %1407 = vmatmul.f32.gmra.mxu0 %v1005
        %v1408 = vpop.f32.mrf.mxu0
        %v1409 = vadd.f32 %v1084, %v1408
        %1410 = vmatmul.f32.gmra.mxu0 %v1007
        %v1411 = vpop.f32.mrf.mxu0
        %v1412 = vadd.f32 %v1084, %v1411
        %1413 = vmatmul.f32.gmra.mxu0 %v1009
        %v1414 = vpop.f32.mrf.mxu0
        %v1415 = vadd.f32 %v1084, %v1414
        %1416 = vmatmul.f32.gmra.mxu0 %v1011
        %v1417 = vpop.f32.mrf.mxu0
        %v1418 = vadd.f32 %v1084, %v1417
        %1419 = vmatmul.f32.gmra.mxu0 %v1013
        %v1420 = vpop.f32.mrf.mxu0
        %v1421 = vadd.f32 %v1084, %v1420
        %1422 = vmatmul.f32.gmra.mxu0 %v1015
        %v1423 = vpop.f32.mrf.mxu0
        %v1424 = vadd.f32 %v1084, %v1423
        %1425 = vdwg.mxu0
        %1426 = vmatpush.msra.mxu0 %v1080
        %1427 = vmatpush.msra.mxu0 %v1078
        %1428 = vmatpush.msra.mxu0 %v1076
        %1429 = vmatpush.msra.mxu0 %v1074
        %1430 = vmatpush.msra.mxu0 %v1072
        %1431 = vmatpush.msra.mxu0 %v1070
        %1432 = vmatpush.msra.mxu0 %v1068
        %1433 = vmatpush.msra.mxu0 %v1066
        %1434 = vmatpush.msra.mxu0 %v1064
        %1435 = vmatpush.msra.mxu0 %v1062
        %1436 = vmatpush.msra.mxu0 %v1060
        %1437 = vmatpush.msra.mxu0 %v1058
        %1438 = vmatpush.msra.mxu0 %v1056
        %1439 = vmatpush.msra.mxu0 %v1054
        %1440 = vmatpush.msra.mxu0 %v1052
        %1441 = vmatpush.msra.mxu0 %v1050
        %1442 = vmatmul.f32.gmra.mxu0 %v954
        %v1443 = vpop.f32.mrf.mxu0
        %v1444 = vadd.f32 %v1331, %v1443
        %1445 = vmatmul.f32.gmra.mxu0 %v956
        %v1446 = vpop.f32.mrf.mxu0
        %v1447 = vadd.f32 %v1334, %v1446
        %1448 = vmatmul.f32.gmra.mxu0 %v958
        %v1449 = vpop.f32.mrf.mxu0
        %v1450 = vadd.f32 %v1337, %v1449
        %1451 = vmatmul.f32.gmra.mxu0 %v960
        %v1452 = vpop.f32.mrf.mxu0
        %v1453 = vadd.f32 %v1340, %v1452
        %1454 = vmatmul.f32.gmra.mxu0 %v962
        %v1455 = vpop.f32.mrf.mxu0
        %v1456 = vadd.f32 %v1343, %v1455
        %1457 = vmatmul.f32.gmra.mxu0 %v964
        %v1458 = vpop.f32.mrf.mxu0
        %v1459 = vadd.f32 %v1346, %v1458
        %1460 = vmatmul.f32.gmra.mxu0 %v966
        %v1461 = vpop.f32.mrf.mxu0
        %v1462 = vadd.f32 %v1349, %v1461
        %1463 = vmatmul.f32.gmra.mxu0 %v968
        %v1464 = vpop.f32.mrf.mxu0
        %v1465 = vadd.f32 %v1352, %v1464
        %1466 = vmatmul.f32.gmra.mxu0 %v970
        %v1467 = vpop.f32.mrf.mxu0
        %v1468 = vadd.f32 %v1355, %v1467
        %1469 = vmatmul.f32.gmra.mxu0 %v972
        %v1470 = vpop.f32.mrf.mxu0
        %v1471 = vadd.f32 %v1358, %v1470
        %1472 = vmatmul.f32.gmra.mxu0 %v974
        %v1473 = vpop.f32.mrf.mxu0
        %v1474 = vadd.f32 %v1361, %v1473
        %1475 = vmatmul.f32.gmra.mxu0 %v976
        %v1476 = vpop.f32.mrf.mxu0
        %v1477 = vadd.f32 %v1364, %v1476
        %1478 = vmatmul.f32.gmra.mxu0 %v978
        %v1479 = vpop.f32.mrf.mxu0
        %v1480 = vadd.f32 %v1367, %v1479
        %1481 = vmatmul.f32.gmra.mxu0 %v980
        %v1482 = vpop.f32.mrf.mxu0
        %v1483 = vadd.f32 %v1370, %v1482
        %1484 = vmatmul.f32.gmra.mxu0 %v982
        %v1485 = vpop.f32.mrf.mxu0
        %v1486 = vadd.f32 %v1373, %v1485
        %1487 = vmatmul.f32.gmra.mxu0 %v984
        %v1488 = vpop.f32.mrf.mxu0
        %v1489 = vadd.f32 %v1376, %v1488
        %1490 = vmatmul.f32.gmra.mxu0 %v986
        %v1491 = vpop.f32.mrf.mxu0
        %v1492 = vadd.f32 %v1379, %v1491
        %1493 = vmatmul.f32.gmra.mxu0 %v988
        %v1494 = vpop.f32.mrf.mxu0
        %v1495 = vadd.f32 %v1382, %v1494
        %1496 = vmatmul.f32.gmra.mxu0 %v990
        %v1497 = vpop.f32.mrf.mxu0
        %v1498 = vadd.f32 %v1385, %v1497
        %1499 = vmatmul.f32.gmra.mxu0 %v992
        %v1500 = vpop.f32.mrf.mxu0
        %v1501 = vadd.f32 %v1388, %v1500
        %1502 = vmatmul.f32.gmra.mxu0 %v994
        %v1503 = vpop.f32.mrf.mxu0
        %v1504 = vadd.f32 %v1391, %v1503
        %1505 = vmatmul.f32.gmra.mxu0 %v996
        %v1506 = vpop.f32.mrf.mxu0
        %v1507 = vadd.f32 %v1394, %v1506
        %1508 = vmatmul.f32.gmra.mxu0 %v998
        %v1509 = vpop.f32.mrf.mxu0
        %v1510 = vadd.f32 %v1397, %v1509
        %1511 = vmatmul.f32.gmra.mxu0 %v1000
        %v1512 = vpop.f32.mrf.mxu0
        %v1513 = vadd.f32 %v1400, %v1512
        %1514 = vmatmul.f32.gmra.mxu0 %v1002
        %v1515 = vpop.f32.mrf.mxu0
        %v1516 = vadd.f32 %v1403, %v1515
        %1517 = vmatmul.f32.gmra.mxu0 %v1004
        %v1518 = vpop.f32.mrf.mxu0
        %v1519 = vadd.f32 %v1406, %v1518
        %1520 = vmatmul.f32.gmra.mxu0 %v1006
        %v1521 = vpop.f32.mrf.mxu0
        %v1522 = vadd.f32 %v1409, %v1521
        %1523 = vmatmul.f32.gmra.mxu0 %v1008
        %v1524 = vpop.f32.mrf.mxu0
        %v1525 = vadd.f32 %v1412, %v1524
        %1526 = vmatmul.f32.gmra.mxu0 %v1010
        %v1527 = vpop.f32.mrf.mxu0
        %v1528 = vadd.f32 %v1415, %v1527
        %1529 = vmatmul.f32.gmra.mxu0 %v1012
        %v1530 = vpop.f32.mrf.mxu0
        %v1531 = vadd.f32 %v1418, %v1530
        %1532 = vmatmul.f32.gmra.mxu0 %v1014
        %v1533 = vpop.f32.mrf.mxu0
        %v1534 = vadd.f32 %v1421, %v1533
        %1535 = vmatmul.f32.gmra.mxu0 %v1016
        %v1536 = vpop.f32.mrf.mxu0
        %v1537 = vadd.f32 %v1424, %v1536
        %1538 = vdwg.mxu0
        %v1539 = vmax.f32 %v1218, 0.0
        %v1540 = vmax.f32 %v1444, 0.0
        %v1541 = vmax.f32 %v1221, 0.0
        %v1542 = vmax.f32 %v1447, 0.0
        %v1543 = vmax.f32 %v1224, 0.0
        %v1544 = vmax.f32 %v1450, 0.0
        %v1545 = vmax.f32 %v1227, 0.0
        %v1546 = vmax.f32 %v1453, 0.0
        %v1547 = vmax.f32 %v1230, 0.0
        %v1548 = vmax.f32 %v1456, 0.0
        %v1549 = vmax.f32 %v1233, 0.0
        %v1550 = vmax.f32 %v1459, 0.0
        %v1551 = vmax.f32 %v1236, 0.0
        %v1552 = vmax.f32 %v1462, 0.0
        %v1553 = vmax.f32 %v1239, 0.0
        %v1554 = vmax.f32 %v1465, 0.0
        %v1555 = vmax.f32 %v1242, 0.0
        %v1556 = vmax.f32 %v1468, 0.0
        %v1557 = vmax.f32 %v1245, 0.0
        %v1558 = vmax.f32 %v1471, 0.0
        %v1559 = vmax.f32 %v1248, 0.0
        %v1560 = vmax.f32 %v1474, 0.0
        %v1561 = vmax.f32 %v1251, 0.0
        %v1562 = vmax.f32 %v1477, 0.0
        %v1563 = vmax.f32 %v1254, 0.0
        %v1564 = vmax.f32 %v1480, 0.0
        %v1565 = vmax.f32 %v1257, 0.0
        %v1566 = vmax.f32 %v1483, 0.0
        %v1567 = vmax.f32 %v1260, 0.0
        %v1568 = vmax.f32 %v1486, 0.0
        %v1569 = vmax.f32 %v1263, 0.0
        %v1570 = vmax.f32 %v1489, 0.0
        %v1571 = vmax.f32 %v1266, 0.0
        %v1572 = vmax.f32 %v1492, 0.0
        %v1573 = vmax.f32 %v1269, 0.0
        %v1574 = vmax.f32 %v1495, 0.0
        %v1575 = vmax.f32 %v1272, 0.0
        %v1576 = vmax.f32 %v1498, 0.0
        %v1577 = vmax.f32 %v1275, 0.0
        %v1578 = vmax.f32 %v1501, 0.0
        %v1579 = vmax.f32 %v1278, 0.0
        %v1580 = vmax.f32 %v1504, 0.0
        %v1581 = vmax.f32 %v1281, 0.0
        %v1582 = vmax.f32 %v1507, 0.0
        %v1583 = vmax.f32 %v1284, 0.0
        %v1584 = vmax.f32 %v1510, 0.0
        %v1585 = vmax.f32 %v1287, 0.0
        %v1586 = vmax.f32 %v1513, 0.0
        %v1587 = vmax.f32 %v1290, 0.0
        %v1588 = vmax.f32 %v1516, 0.0
        %v1589 = vmax.f32 %v1293, 0.0
        %v1590 = vmax.f32 %v1519, 0.0
        %v1591 = vmax.f32 %v1296, 0.0
        %v1592 = vmax.f32 %v1522, 0.0
        %v1593 = vmax.f32 %v1299, 0.0
        %v1594 = vmax.f32 %v1525, 0.0
        %v1595 = vmax.f32 %v1302, 0.0
        %v1596 = vmax.f32 %v1528, 0.0
        %v1597 = vmax.f32 %v1305, 0.0
        %v1598 = vmax.f32 %v1531, 0.0
        %v1599 = vmax.f32 %v1308, 0.0
        %v1600 = vmax.f32 %v1534, 0.0
        %v1601 = vmax.f32 %v1311, 0.0
        %v1602 = vmax.f32 %v1537, 0.0
        %v1603 = vld [vmem:[#allocation2] sm:$0xff]
        %v1604 = vld [vmem:[#allocation2 + $0x8] sm:$0xff]
        %v1605 = vld [vmem:[#allocation2 + $0x10] sm:$0xff]
        %v1606 = vld [vmem:[#allocation2 + $0x18] sm:$0xff]
        %v1607 = vld [vmem:[#allocation2 + $0x20] sm:$0xff]
        %v1608 = vld [vmem:[#allocation2 + $0x28] sm:$0xff]
        %v1609 = vld [vmem:[#allocation2 + $0x30] sm:$0xff]
        %v1610 = vld [vmem:[#allocation2 + $0x38] sm:$0xff]
        %v1611 = vld [vmem:[#allocation2 + $0x40] sm:$0xff]
        %v1612 = vld [vmem:[#allocation2 + $0x48] sm:$0xff]
        %v1613 = vld [vmem:[#allocation2 + $0x50] sm:$0xff]
        %v1614 = vld [vmem:[#allocation2 + $0x58] sm:$0xff]
        %v1615 = vld [vmem:[#allocation2 + $0x60] sm:$0xff]
        %v1616 = vld [vmem:[#allocation2 + $0x68] sm:$0xff]
        %v1617 = vld [vmem:[#allocation2 + $0x70] sm:$0xff]
        %v1618 = vld [vmem:[#allocation2 + $0x78] sm:$0xff]
        %v1619 = vld [vmem:[#allocation2 + $0x80] sm:$0xff]
        %v1620 = vld [vmem:[#allocation2 + $0x88] sm:$0xff]
        %v1621 = vld [vmem:[#allocation2 + $0x90] sm:$0xff]
        %v1622 = vld [vmem:[#allocation2 + $0x98] sm:$0xff]
        %v1623 = vld [vmem:[#allocation2 + $0xa0] sm:$0xff]
        %v1624 = vld [vmem:[#allocation2 + $0xa8] sm:$0xff]
        %v1625 = vld [vmem:[#allocation2 + $0xb0] sm:$0xff]
        %v1626 = vld [vmem:[#allocation2 + $0xb8] sm:$0xff]
        %v1627 = vld [vmem:[#allocation2 + $0xc0] sm:$0xff]
        %v1628 = vld [vmem:[#allocation2 + $0xc8] sm:$0xff]
        %v1629 = vld [vmem:[#allocation2 + $0xd0] sm:$0xff]
        %v1630 = vld [vmem:[#allocation2 + $0xd8] sm:$0xff]
        %v1631 = vld [vmem:[#allocation2 + $0xe0] sm:$0xff]
        %v1632 = vld [vmem:[#allocation2 + $0xe8] sm:$0xff]
        %v1633 = vld [vmem:[#allocation2 + $0xf0] sm:$0xff]
        %v1634 = vld [vmem:[#allocation2 + $0xf8] sm:$0xff]
        %v1635 = vld [vmem:[#allocation2 + $0x100] sm:$0xff]
        %v1636 = vld [vmem:[#allocation2 + $0x108] sm:$0xff]
        %v1637 = vld [vmem:[#allocation2 + $0x110] sm:$0xff]
        %v1638 = vld [vmem:[#allocation2 + $0x118] sm:$0xff]
        %v1639 = vld [vmem:[#allocation2 + $0x120] sm:$0xff]
        %v1640 = vld [vmem:[#allocation2 + $0x128] sm:$0xff]
        %v1641 = vld [vmem:[#allocation2 + $0x130] sm:$0xff]
        %v1642 = vld [vmem:[#allocation2 + $0x138] sm:$0xff]
        %v1643 = vld [vmem:[#allocation2 + $0x140] sm:$0xff]
        %v1644 = vld [vmem:[#allocation2 + $0x148] sm:$0xff]
        %v1645 = vld [vmem:[#allocation2 + $0x150] sm:$0xff]
        %v1646 = vld [vmem:[#allocation2 + $0x158] sm:$0xff]
        %v1647 = vld [vmem:[#allocation2 + $0x160] sm:$0xff]
        %v1648 = vld [vmem:[#allocation2 + $0x168] sm:$0xff]
        %v1649 = vld [vmem:[#allocation2 + $0x170] sm:$0xff]
        %v1650 = vld [vmem:[#allocation2 + $0x178] sm:$0xff]
        %v1651 = vld [vmem:[#allocation2 + $0x180] sm:$0xff]
        %v1652 = vld [vmem:[#allocation2 + $0x188] sm:$0xff]
        %v1653 = vld [vmem:[#allocation2 + $0x190] sm:$0xff]
        %v1654 = vld [vmem:[#allocation2 + $0x198] sm:$0xff]
        %v1655 = vld [vmem:[#allocation2 + $0x1a0] sm:$0xff]
        %v1656 = vld [vmem:[#allocation2 + $0x1a8] sm:$0xff]
        %v1657 = vld [vmem:[#allocation2 + $0x1b0] sm:$0xff]
        %v1658 = vld [vmem:[#allocation2 + $0x1b8] sm:$0xff]
        %v1659 = vld [vmem:[#allocation2 + $0x1c0] sm:$0xff]
        %v1660 = vld [vmem:[#allocation2 + $0x1c8] sm:$0xff]
        %v1661 = vld [vmem:[#allocation2 + $0x1d0] sm:$0xff]
        %v1662 = vld [vmem:[#allocation2 + $0x1d8] sm:$0xff]
        %v1663 = vld [vmem:[#allocation2 + $0x1e0] sm:$0xff]
        %v1664 = vld [vmem:[#allocation2 + $0x1e8] sm:$0xff]
        %v1665 = vld [vmem:[#allocation2 + $0x1f0] sm:$0xff]
        %v1666 = vld [vmem:[#allocation2 + $0x1f8] sm:$0xff]
        %v1667 = vld [vmem:[%s8] sm:$0x3]
        %v1669 = vperm.slane %v1667, 0
        %v1670 = vperm.slane %v1667, 1
        %1673 = vmatpush.msra.mxu0 %v1633
        %1674 = vmatpush.msra.mxu0 %v1631
        %1675 = vmatpush.msra.mxu0 %v1629
        %1676 = vmatpush.msra.mxu0 %v1627
        %1677 = vmatpush.msra.mxu0 %v1625
        %1678 = vmatpush.msra.mxu0 %v1623
        %1679 = vmatpush.msra.mxu0 %v1621
        %1680 = vmatpush.msra.mxu0 %v1619
        %1681 = vmatpush.msra.mxu0 %v1617
        %1682 = vmatpush.msra.mxu0 %v1615
        %1683 = vmatpush.msra.mxu0 %v1613
        %1684 = vmatpush.msra.mxu0 %v1611
        %1685 = vmatpush.msra.mxu0 %v1609
        %1686 = vmatpush.msra.mxu0 %v1607
        %1687 = vmatpush.msra.mxu0 %v1605
        %1688 = vmatpush.msra.mxu0 %v1603
        %1689 = vmatmul.f32.gmra.mxu0 %v1539
        %v1690 = vpop.f32.mrf.mxu0
        %v1691 = vadd.f32 %v1669, %v1690
        %1692 = vmatmul.f32.gmra.mxu0 %v1541
        %v1693 = vpop.f32.mrf.mxu0
        %v1694 = vadd.f32 %v1669, %v1693
        %1695 = vmatmul.f32.gmra.mxu0 %v1543
        %v1696 = vpop.f32.mrf.mxu0
        %v1697 = vadd.f32 %v1669, %v1696
        %1698 = vmatmul.f32.gmra.mxu0 %v1545
        %v1699 = vpop.f32.mrf.mxu0
        %v1700 = vadd.f32 %v1669, %v1699
        %1701 = vmatmul.f32.gmra.mxu0 %v1547
        %v1702 = vpop.f32.mrf.mxu0
        %v1703 = vadd.f32 %v1669, %v1702
        %1704 = vmatmul.f32.gmra.mxu0 %v1549
        %v1705 = vpop.f32.mrf.mxu0
        %v1706 = vadd.f32 %v1669, %v1705
        %1707 = vmatmul.f32.gmra.mxu0 %v1551
        %v1708 = vpop.f32.mrf.mxu0
        %v1709 = vadd.f32 %v1669, %v1708
        %1710 = vmatmul.f32.gmra.mxu0 %v1553
        %v1711 = vpop.f32.mrf.mxu0
        %v1712 = vadd.f32 %v1669, %v1711
        %1713 = vmatmul.f32.gmra.mxu0 %v1555
        %v1714 = vpop.f32.mrf.mxu0
        %v1715 = vadd.f32 %v1669, %v1714
        %1716 = vmatmul.f32.gmra.mxu0 %v1557
        %v1717 = vpop.f32.mrf.mxu0
        %v1718 = vadd.f32 %v1669, %v1717
        %1719 = vmatmul.f32.gmra.mxu0 %v1559
        %v1720 = vpop.f32.mrf.mxu0
        %v1721 = vadd.f32 %v1669, %v1720
        %1722 = vmatmul.f32.gmra.mxu0 %v1561
        %v1723 = vpop.f32.mrf.mxu0
        %v1724 = vadd.f32 %v1669, %v1723
        %1725 = vmatmul.f32.gmra.mxu0 %v1563
        %v1726 = vpop.f32.mrf.mxu0
        %v1727 = vadd.f32 %v1669, %v1726
        %1728 = vmatmul.f32.gmra.mxu0 %v1565
        %v1729 = vpop.f32.mrf.mxu0
        %v1730 = vadd.f32 %v1669, %v1729
        %1731 = vmatmul.f32.gmra.mxu0 %v1567
        %v1732 = vpop.f32.mrf.mxu0
        %v1733 = vadd.f32 %v1669, %v1732
        %1734 = vmatmul.f32.gmra.mxu0 %v1569
        %v1735 = vpop.f32.mrf.mxu0
        %v1736 = vadd.f32 %v1669, %v1735
        %1737 = vmatmul.f32.gmra.mxu0 %v1571
        %v1738 = vpop.f32.mrf.mxu0
        %v1739 = vadd.f32 %v1669, %v1738
        %1740 = vmatmul.f32.gmra.mxu0 %v1573
        %v1741 = vpop.f32.mrf.mxu0
        %v1742 = vadd.f32 %v1669, %v1741
        %1743 = vmatmul.f32.gmra.mxu0 %v1575
        %v1744 = vpop.f32.mrf.mxu0
        %v1745 = vadd.f32 %v1669, %v1744
        %1746 = vmatmul.f32.gmra.mxu0 %v1577
        %v1747 = vpop.f32.mrf.mxu0
        %v1748 = vadd.f32 %v1669, %v1747
        %1749 = vmatmul.f32.gmra.mxu0 %v1579
        %v1750 = vpop.f32.mrf.mxu0
        %v1751 = vadd.f32 %v1669, %v1750
        %1752 = vmatmul.f32.gmra.mxu0 %v1581
        %v1753 = vpop.f32.mrf.mxu0
        %v1754 = vadd.f32 %v1669, %v1753
        %1755 = vmatmul.f32.gmra.mxu0 %v1583
        %v1756 = vpop.f32.mrf.mxu0
        %v1757 = vadd.f32 %v1669, %v1756
        %1758 = vmatmul.f32.gmra.mxu0 %v1585
        %v1759 = vpop.f32.mrf.mxu0
        %v1760 = vadd.f32 %v1669, %v1759
        %1761 = vmatmul.f32.gmra.mxu0 %v1587
        %v1762 = vpop.f32.mrf.mxu0
        %v1763 = vadd.f32 %v1669, %v1762
        %1764 = vmatmul.f32.gmra.mxu0 %v1589
        %v1765 = vpop.f32.mrf.mxu0
        %v1766 = vadd.f32 %v1669, %v1765
        %1767 = vmatmul.f32.gmra.mxu0 %v1591
        %v1768 = vpop.f32.mrf.mxu0
        %v1769 = vadd.f32 %v1669, %v1768
        %1770 = vmatmul.f32.gmra.mxu0 %v1593
        %v1771 = vpop.f32.mrf.mxu0
        %v1772 = vadd.f32 %v1669, %v1771
        %1773 = vmatmul.f32.gmra.mxu0 %v1595
        %v1774 = vpop.f32.mrf.mxu0
        %v1775 = vadd.f32 %v1669, %v1774
        %1776 = vmatmul.f32.gmra.mxu0 %v1597
        %v1777 = vpop.f32.mrf.mxu0
        %v1778 = vadd.f32 %v1669, %v1777
        %1779 = vmatmul.f32.gmra.mxu0 %v1599
        %v1780 = vpop.f32.mrf.mxu0
        %v1781 = vadd.f32 %v1669, %v1780
        %1782 = vmatmul.f32.gmra.mxu0 %v1601
        %v1783 = vpop.f32.mrf.mxu0
        %v1784 = vadd.f32 %v1669, %v1783
        %1785 = vdwg.mxu0
        %1786 = vmatpush.msra.mxu0 %v1665
        %1787 = vmatpush.msra.mxu0 %v1663
        %1788 = vmatpush.msra.mxu0 %v1661
        %1789 = vmatpush.msra.mxu0 %v1659
        %1790 = vmatpush.msra.mxu0 %v1657
        %1791 = vmatpush.msra.mxu0 %v1655
        %1792 = vmatpush.msra.mxu0 %v1653
        %1793 = vmatpush.msra.mxu0 %v1651
        %1794 = vmatpush.msra.mxu0 %v1649
        %1795 = vmatpush.msra.mxu0 %v1647
        %1796 = vmatpush.msra.mxu0 %v1645
        %1797 = vmatpush.msra.mxu0 %v1643
        %1798 = vmatpush.msra.mxu0 %v1641
        %1799 = vmatpush.msra.mxu0 %v1639
        %1800 = vmatpush.msra.mxu0 %v1637
        %1801 = vmatpush.msra.mxu0 %v1635
        %1802 = vmatmul.f32.gmra.mxu0 %v1540
        %v1803 = vpop.f32.mrf.mxu0
        %v1804 = vadd.f32 %v1691, %v1803
        %1805 = vmatmul.f32.gmra.mxu0 %v1542
        %v1806 = vpop.f32.mrf.mxu0
        %v1807 = vadd.f32 %v1694, %v1806
        %1808 = vmatmul.f32.gmra.mxu0 %v1544
        %v1809 = vpop.f32.mrf.mxu0
        %v1810 = vadd.f32 %v1697, %v1809
        %1811 = vmatmul.f32.gmra.mxu0 %v1546
        %v1812 = vpop.f32.mrf.mxu0
        %v1813 = vadd.f32 %v1700, %v1812
        %1814 = vmatmul.f32.gmra.mxu0 %v1548
        %v1815 = vpop.f32.mrf.mxu0
        %v1816 = vadd.f32 %v1703, %v1815
        %1817 = vmatmul.f32.gmra.mxu0 %v1550
        %v1818 = vpop.f32.mrf.mxu0
        %v1819 = vadd.f32 %v1706, %v1818
        %1820 = vmatmul.f32.gmra.mxu0 %v1552
        %v1821 = vpop.f32.mrf.mxu0
        %v1822 = vadd.f32 %v1709, %v1821
        %1823 = vmatmul.f32.gmra.mxu0 %v1554
        %v1824 = vpop.f32.mrf.mxu0
        %v1825 = vadd.f32 %v1712, %v1824
        %1826 = vmatmul.f32.gmra.mxu0 %v1556
        %v1827 = vpop.f32.mrf.mxu0
        %v1828 = vadd.f32 %v1715, %v1827
        %1829 = vmatmul.f32.gmra.mxu0 %v1558
        %v1830 = vpop.f32.mrf.mxu0
        %v1831 = vadd.f32 %v1718, %v1830
        %1832 = vmatmul.f32.gmra.mxu0 %v1560
        %v1833 = vpop.f32.mrf.mxu0
        %v1834 = vadd.f32 %v1721, %v1833
        %1835 = vmatmul.f32.gmra.mxu0 %v1562
        %v1836 = vpop.f32.mrf.mxu0
        %v1837 = vadd.f32 %v1724, %v1836
        %1838 = vmatmul.f32.gmra.mxu0 %v1564
        %v1839 = vpop.f32.mrf.mxu0
        %v1840 = vadd.f32 %v1727, %v1839
        %1841 = vmatmul.f32.gmra.mxu0 %v1566
        %v1842 = vpop.f32.mrf.mxu0
        %v1843 = vadd.f32 %v1730, %v1842
        %1844 = vmatmul.f32.gmra.mxu0 %v1568
        %v1845 = vpop.f32.mrf.mxu0
        %v1846 = vadd.f32 %v1733, %v1845
        %1847 = vmatmul.f32.gmra.mxu0 %v1570
        %v1848 = vpop.f32.mrf.mxu0
        %v1849 = vadd.f32 %v1736, %v1848
        %1850 = vmatmul.f32.gmra.mxu0 %v1572
        %v1851 = vpop.f32.mrf.mxu0
        %v1852 = vadd.f32 %v1739, %v1851
        %1853 = vmatmul.f32.gmra.mxu0 %v1574
        %v1854 = vpop.f32.mrf.mxu0
        %v1855 = vadd.f32 %v1742, %v1854
        %1856 = vmatmul.f32.gmra.mxu0 %v1576
        %v1857 = vpop.f32.mrf.mxu0
        %v1858 = vadd.f32 %v1745, %v1857
        %1859 = vmatmul.f32.gmra.mxu0 %v1578
        %v1860 = vpop.f32.mrf.mxu0
        %v1861 = vadd.f32 %v1748, %v1860
        %1862 = vmatmul.f32.gmra.mxu0 %v1580
        %v1863 = vpop.f32.mrf.mxu0
        %v1864 = vadd.f32 %v1751, %v1863
        %1865 = vmatmul.f32.gmra.mxu0 %v1582
        %v1866 = vpop.f32.mrf.mxu0
        %v1867 = vadd.f32 %v1754, %v1866
        %1868 = vmatmul.f32.gmra.mxu0 %v1584
        %v1869 = vpop.f32.mrf.mxu0
        %v1870 = vadd.f32 %v1757, %v1869
        %1871 = vmatmul.f32.gmra.mxu0 %v1586
        %v1872 = vpop.f32.mrf.mxu0
        %v1873 = vadd.f32 %v1760, %v1872
        %1874 = vmatmul.f32.gmra.mxu0 %v1588
        %v1875 = vpop.f32.mrf.mxu0
        %v1876 = vadd.f32 %v1763, %v1875
        %1877 = vmatmul.f32.gmra.mxu0 %v1590
        %v1878 = vpop.f32.mrf.mxu0
        %v1879 = vadd.f32 %v1766, %v1878
        %1880 = vmatmul.f32.gmra.mxu0 %v1592
        %v1881 = vpop.f32.mrf.mxu0
        %v1882 = vadd.f32 %v1769, %v1881
        %1883 = vmatmul.f32.gmra.mxu0 %v1594
        %v1884 = vpop.f32.mrf.mxu0
        %v1885 = vadd.f32 %v1772, %v1884
        %1886 = vmatmul.f32.gmra.mxu0 %v1596
        %v1887 = vpop.f32.mrf.mxu0
        %v1888 = vadd.f32 %v1775, %v1887
        %1889 = vmatmul.f32.gmra.mxu0 %v1598
        %v1890 = vpop.f32.mrf.mxu0
        %v1891 = vadd.f32 %v1778, %v1890
        %1892 = vmatmul.f32.gmra.mxu0 %v1600
        %v1893 = vpop.f32.mrf.mxu0
        %v1894 = vadd.f32 %v1781, %v1893
        %1895 = vmatmul.f32.gmra.mxu0 %v1602
        %v1896 = vpop.f32.mrf.mxu0
        %v1897 = vadd.f32 %v1784, %v1896
        %1898 = vdwg.mxu0
        %1899 = vmatpush.msra.mxu0 %v1634
        %1900 = vmatpush.msra.mxu0 %v1632
        %1901 = vmatpush.msra.mxu0 %v1630
        %1902 = vmatpush.msra.mxu0 %v1628
        %1903 = vmatpush.msra.mxu0 %v1626
        %1904 = vmatpush.msra.mxu0 %v1624
        %1905 = vmatpush.msra.mxu0 %v1622
        %1906 = vmatpush.msra.mxu0 %v1620
        %1907 = vmatpush.msra.mxu0 %v1618
        %1908 = vmatpush.msra.mxu0 %v1616
        %1909 = vmatpush.msra.mxu0 %v1614
        %1910 = vmatpush.msra.mxu0 %v1612
        %1911 = vmatpush.msra.mxu0 %v1610
        %1912 = vmatpush.msra.mxu0 %v1608
        %1913 = vmatpush.msra.mxu0 %v1606
        %1914 = vmatpush.msra.mxu0 %v1604
        %1915 = vmatmul.f32.gmra.mxu0 %v1539
        %v1916 = vpop.f32.mrf.mxu0
        %v1917 = vadd.f32 %v1670, %v1916
        %1918 = vmatmul.f32.gmra.mxu0 %v1541
        %v1919 = vpop.f32.mrf.mxu0
        %v1920 = vadd.f32 %v1670, %v1919
        %1921 = vmatmul.f32.gmra.mxu0 %v1543
        %v1922 = vpop.f32.mrf.mxu0
        %v1923 = vadd.f32 %v1670, %v1922
        %1924 = vmatmul.f32.gmra.mxu0 %v1545
        %v1925 = vpop.f32.mrf.mxu0
        %v1926 = vadd.f32 %v1670, %v1925
        %1927 = vmatmul.f32.gmra.mxu0 %v1547
        %v1928 = vpop.f32.mrf.mxu0
        %v1929 = vadd.f32 %v1670, %v1928
        %1930 = vmatmul.f32.gmra.mxu0 %v1549
        %v1931 = vpop.f32.mrf.mxu0
        %v1932 = vadd.f32 %v1670, %v1931
        %1933 = vmatmul.f32.gmra.mxu0 %v1551
        %v1934 = vpop.f32.mrf.mxu0
        %v1935 = vadd.f32 %v1670, %v1934
        %1936 = vmatmul.f32.gmra.mxu0 %v1553
        %v1937 = vpop.f32.mrf.mxu0
        %v1938 = vadd.f32 %v1670, %v1937
        %1939 = vmatmul.f32.gmra.mxu0 %v1555
        %v1940 = vpop.f32.mrf.mxu0
        %v1941 = vadd.f32 %v1670, %v1940
        %1942 = vmatmul.f32.gmra.mxu0 %v1557
        %v1943 = vpop.f32.mrf.mxu0
        %v1944 = vadd.f32 %v1670, %v1943
        %1945 = vmatmul.f32.gmra.mxu0 %v1559
        %v1946 = vpop.f32.mrf.mxu0
        %v1947 = vadd.f32 %v1670, %v1946
        %1948 = vmatmul.f32.gmra.mxu0 %v1561
        %v1949 = vpop.f32.mrf.mxu0
        %v1950 = vadd.f32 %v1670, %v1949
        %1951 = vmatmul.f32.gmra.mxu0 %v1563
        %v1952 = vpop.f32.mrf.mxu0
        %v1953 = vadd.f32 %v1670, %v1952
        %1954 = vmatmul.f32.gmra.mxu0 %v1565
        %v1955 = vpop.f32.mrf.mxu0
        %v1956 = vadd.f32 %v1670, %v1955
        %1957 = vmatmul.f32.gmra.mxu0 %v1567
        %v1958 = vpop.f32.mrf.mxu0
        %v1959 = vadd.f32 %v1670, %v1958
        %1960 = vmatmul.f32.gmra.mxu0 %v1569
        %v1961 = vpop.f32.mrf.mxu0
        %v1962 = vadd.f32 %v1670, %v1961
        %1963 = vmatmul.f32.gmra.mxu0 %v1571
        %v1964 = vpop.f32.mrf.mxu0
        %v1965 = vadd.f32 %v1670, %v1964
        %1966 = vmatmul.f32.gmra.mxu0 %v1573
        %v1967 = vpop.f32.mrf.mxu0
        %v1968 = vadd.f32 %v1670, %v1967
        %1969 = vmatmul.f32.gmra.mxu0 %v1575
        %v1970 = vpop.f32.mrf.mxu0
        %v1971 = vadd.f32 %v1670, %v1970
        %1972 = vmatmul.f32.gmra.mxu0 %v1577
        %v1973 = vpop.f32.mrf.mxu0
        %v1974 = vadd.f32 %v1670, %v1973
        %1975 = vmatmul.f32.gmra.mxu0 %v1579
        %v1976 = vpop.f32.mrf.mxu0
        %v1977 = vadd.f32 %v1670, %v1976
        %1978 = vmatmul.f32.gmra.mxu0 %v1581
        %v1979 = vpop.f32.mrf.mxu0
        %v1980 = vadd.f32 %v1670, %v1979
        %1981 = vmatmul.f32.gmra.mxu0 %v1583
        %v1982 = vpop.f32.mrf.mxu0
        %v1983 = vadd.f32 %v1670, %v1982
        %1984 = vmatmul.f32.gmra.mxu0 %v1585
        %v1985 = vpop.f32.mrf.mxu0
        %v1986 = vadd.f32 %v1670, %v1985
        %1987 = vmatmul.f32.gmra.mxu0 %v1587
        %v1988 = vpop.f32.mrf.mxu0
        %v1989 = vadd.f32 %v1670, %v1988
        %1990 = vmatmul.f32.gmra.mxu0 %v1589
        %v1991 = vpop.f32.mrf.mxu0
        %v1992 = vadd.f32 %v1670, %v1991
        %1993 = vmatmul.f32.gmra.mxu0 %v1591
        %v1994 = vpop.f32.mrf.mxu0
        %v1995 = vadd.f32 %v1670, %v1994
        %1996 = vmatmul.f32.gmra.mxu0 %v1593
        %v1997 = vpop.f32.mrf.mxu0
        %v1998 = vadd.f32 %v1670, %v1997
        %1999 = vmatmul.f32.gmra.mxu0 %v1595
        %v2000 = vpop.f32.mrf.mxu0
        %v2001 = vadd.f32 %v1670, %v2000
        %2002 = vmatmul.f32.gmra.mxu0 %v1597
        %v2003 = vpop.f32.mrf.mxu0
        %v2004 = vadd.f32 %v1670, %v2003
        %2005 = vmatmul.f32.gmra.mxu0 %v1599
        %v2006 = vpop.f32.mrf.mxu0
        %v2007 = vadd.f32 %v1670, %v2006
        %2008 = vmatmul.f32.gmra.mxu0 %v1601
        %v2009 = vpop.f32.mrf.mxu0
        %v2010 = vadd.f32 %v1670, %v2009
        %2011 = vdwg.mxu0
        %2012 = vmatpush.msra.mxu0 %v1666
        %2013 = vmatpush.msra.mxu0 %v1664
        %2014 = vmatpush.msra.mxu0 %v1662
        %2015 = vmatpush.msra.mxu0 %v1660
        %2016 = vmatpush.msra.mxu0 %v1658
        %2017 = vmatpush.msra.mxu0 %v1656
        %2018 = vmatpush.msra.mxu0 %v1654
        %2019 = vmatpush.msra.mxu0 %v1652
        %2020 = vmatpush.msra.mxu0 %v1650
        %2021 = vmatpush.msra.mxu0 %v1648
        %2022 = vmatpush.msra.mxu0 %v1646
        %2023 = vmatpush.msra.mxu0 %v1644
        %2024 = vmatpush.msra.mxu0 %v1642
        %2025 = vmatpush.msra.mxu0 %v1640
        %2026 = vmatpush.msra.mxu0 %v1638
        %2027 = vmatpush.msra.mxu0 %v1636
        %2028 = vmatmul.f32.gmra.mxu0 %v1540
        %v2029 = vpop.f32.mrf.mxu0
        %v2030 = vadd.f32 %v1917, %v2029
        %2031 = vmatmul.f32.gmra.mxu0 %v1542
        %v2032 = vpop.f32.mrf.mxu0
        %v2033 = vadd.f32 %v1920, %v2032
        %2034 = vmatmul.f32.gmra.mxu0 %v1544
        %v2035 = vpop.f32.mrf.mxu0
        %v2036 = vadd.f32 %v1923, %v2035
        %2037 = vmatmul.f32.gmra.mxu0 %v1546
        %v2038 = vpop.f32.mrf.mxu0
        %v2039 = vadd.f32 %v1926, %v2038
        %2040 = vmatmul.f32.gmra.mxu0 %v1548
        %v2041 = vpop.f32.mrf.mxu0
        %v2042 = vadd.f32 %v1929, %v2041
        %2043 = vmatmul.f32.gmra.mxu0 %v1550
        %v2044 = vpop.f32.mrf.mxu0
        %v2045 = vadd.f32 %v1932, %v2044
        %2046 = vmatmul.f32.gmra.mxu0 %v1552
        %v2047 = vpop.f32.mrf.mxu0
        %v2048 = vadd.f32 %v1935, %v2047
        %2049 = vmatmul.f32.gmra.mxu0 %v1554
        %v2050 = vpop.f32.mrf.mxu0
        %v2051 = vadd.f32 %v1938, %v2050
        %2052 = vmatmul.f32.gmra.mxu0 %v1556
        %v2053 = vpop.f32.mrf.mxu0
        %v2054 = vadd.f32 %v1941, %v2053
        %2055 = vmatmul.f32.gmra.mxu0 %v1558
        %v2056 = vpop.f32.mrf.mxu0
        %v2057 = vadd.f32 %v1944, %v2056
        %2058 = vmatmul.f32.gmra.mxu0 %v1560
        %v2059 = vpop.f32.mrf.mxu0
        %v2060 = vadd.f32 %v1947, %v2059
        %2061 = vmatmul.f32.gmra.mxu0 %v1562
        %v2062 = vpop.f32.mrf.mxu0
        %v2063 = vadd.f32 %v1950, %v2062
        %2064 = vmatmul.f32.gmra.mxu0 %v1564
        %v2065 = vpop.f32.mrf.mxu0
        %v2066 = vadd.f32 %v1953, %v2065
        %2067 = vmatmul.f32.gmra.mxu0 %v1566
        %v2068 = vpop.f32.mrf.mxu0
        %v2069 = vadd.f32 %v1956, %v2068
        %2070 = vmatmul.f32.gmra.mxu0 %v1568
        %v2071 = vpop.f32.mrf.mxu0
        %v2072 = vadd.f32 %v1959, %v2071
        %2073 = vmatmul.f32.gmra.mxu0 %v1570
        %v2074 = vpop.f32.mrf.mxu0
        %v2075 = vadd.f32 %v1962, %v2074
        %2076 = vmatmul.f32.gmra.mxu0 %v1572
        %v2077 = vpop.f32.mrf.mxu0
        %v2078 = vadd.f32 %v1965, %v2077
        %2079 = vmatmul.f32.gmra.mxu0 %v1574
        %v2080 = vpop.f32.mrf.mxu0
        %v2081 = vadd.f32 %v1968, %v2080
        %2082 = vmatmul.f32.gmra.mxu0 %v1576
        %v2083 = vpop.f32.mrf.mxu0
        %v2084 = vadd.f32 %v1971, %v2083
        %2085 = vmatmul.f32.gmra.mxu0 %v1578
        %v2086 = vpop.f32.mrf.mxu0
        %v2087 = vadd.f32 %v1974, %v2086
        %2088 = vmatmul.f32.gmra.mxu0 %v1580
        %v2089 = vpop.f32.mrf.mxu0
        %v2090 = vadd.f32 %v1977, %v2089
        %2091 = vmatmul.f32.gmra.mxu0 %v1582
        %v2092 = vpop.f32.mrf.mxu0
        %v2093 = vadd.f32 %v1980, %v2092
        %2094 = vmatmul.f32.gmra.mxu0 %v1584
        %v2095 = vpop.f32.mrf.mxu0
        %v2096 = vadd.f32 %v1983, %v2095
        %2097 = vmatmul.f32.gmra.mxu0 %v1586
        %v2098 = vpop.f32.mrf.mxu0
        %v2099 = vadd.f32 %v1986, %v2098
        %2100 = vmatmul.f32.gmra.mxu0 %v1588
        %v2101 = vpop.f32.mrf.mxu0
        %v2102 = vadd.f32 %v1989, %v2101
        %2103 = vmatmul.f32.gmra.mxu0 %v1590
        %v2104 = vpop.f32.mrf.mxu0
        %v2105 = vadd.f32 %v1992, %v2104
        %2106 = vmatmul.f32.gmra.mxu0 %v1592
        %v2107 = vpop.f32.mrf.mxu0
        %v2108 = vadd.f32 %v1995, %v2107
        %2109 = vmatmul.f32.gmra.mxu0 %v1594
        %v2110 = vpop.f32.mrf.mxu0
        %v2111 = vadd.f32 %v1998, %v2110
        %2112 = vmatmul.f32.gmra.mxu0 %v1596
        %v2113 = vpop.f32.mrf.mxu0
        %v2114 = vadd.f32 %v2001, %v2113
        %2115 = vmatmul.f32.gmra.mxu0 %v1598
        %v2116 = vpop.f32.mrf.mxu0
        %v2117 = vadd.f32 %v2004, %v2116
        %2118 = vmatmul.f32.gmra.mxu0 %v1600
        %v2119 = vpop.f32.mrf.mxu0
        %v2120 = vadd.f32 %v2007, %v2119
        %2121 = vmatmul.f32.gmra.mxu0 %v1602
        %v2122 = vpop.f32.mrf.mxu0
        %v2123 = vadd.f32 %v2010, %v2122
        %2124 = vdwg.mxu0
        %v2125 = vmax.f32 %v1804, 0.0
        %v2126 = vmax.f32 %v2030, 0.0
        %v2127 = vmax.f32 %v1807, 0.0
        %v2128 = vmax.f32 %v2033, 0.0
        %v2129 = vmax.f32 %v1810, 0.0
        %v2130 = vmax.f32 %v2036, 0.0
        %v2131 = vmax.f32 %v1813, 0.0
        %v2132 = vmax.f32 %v2039, 0.0
        %v2133 = vmax.f32 %v1816, 0.0
        %v2134 = vmax.f32 %v2042, 0.0
        %v2135 = vmax.f32 %v1819, 0.0
        %v2136 = vmax.f32 %v2045, 0.0
        %v2137 = vmax.f32 %v1822, 0.0
        %v2138 = vmax.f32 %v2048, 0.0
        %v2139 = vmax.f32 %v1825, 0.0
        %v2140 = vmax.f32 %v2051, 0.0
        %v2141 = vmax.f32 %v1828, 0.0
        %v2142 = vmax.f32 %v2054, 0.0
        %v2143 = vmax.f32 %v1831, 0.0
        %v2144 = vmax.f32 %v2057, 0.0
        %v2145 = vmax.f32 %v1834, 0.0
        %v2146 = vmax.f32 %v2060, 0.0
        %v2147 = vmax.f32 %v1837, 0.0
        %v2148 = vmax.f32 %v2063, 0.0
        %v2149 = vmax.f32 %v1840, 0.0
        %v2150 = vmax.f32 %v2066, 0.0
        %v2151 = vmax.f32 %v1843, 0.0
        %v2152 = vmax.f32 %v2069, 0.0
        %v2153 = vmax.f32 %v1846, 0.0
        %v2154 = vmax.f32 %v2072, 0.0
        %v2155 = vmax.f32 %v1849, 0.0
        %v2156 = vmax.f32 %v2075, 0.0
        %v2157 = vmax.f32 %v1852, 0.0
        %v2158 = vmax.f32 %v2078, 0.0
        %v2159 = vmax.f32 %v1855, 0.0
        %v2160 = vmax.f32 %v2081, 0.0
        %v2161 = vmax.f32 %v1858, 0.0
        %v2162 = vmax.f32 %v2084, 0.0
        %v2163 = vmax.f32 %v1861, 0.0
        %v2164 = vmax.f32 %v2087, 0.0
        %v2165 = vmax.f32 %v1864, 0.0
        %v2166 = vmax.f32 %v2090, 0.0
        %v2167 = vmax.f32 %v1867, 0.0
        %v2168 = vmax.f32 %v2093, 0.0
        %v2169 = vmax.f32 %v1870, 0.0
        %v2170 = vmax.f32 %v2096, 0.0
        %v2171 = vmax.f32 %v1873, 0.0
        %v2172 = vmax.f32 %v2099, 0.0
        %v2173 = vmax.f32 %v1876, 0.0
        %v2174 = vmax.f32 %v2102, 0.0
        %v2175 = vmax.f32 %v1879, 0.0
        %v2176 = vmax.f32 %v2105, 0.0
        %v2177 = vmax.f32 %v1882, 0.0
        %v2178 = vmax.f32 %v2108, 0.0
        %v2179 = vmax.f32 %v1885, 0.0
        %v2180 = vmax.f32 %v2111, 0.0
        %v2181 = vmax.f32 %v1888, 0.0
        %v2182 = vmax.f32 %v2114, 0.0
        %v2183 = vmax.f32 %v1891, 0.0
        %v2184 = vmax.f32 %v2117, 0.0
        %v2185 = vmax.f32 %v1894, 0.0
        %v2186 = vmax.f32 %v2120, 0.0
        %v2187 = vmax.f32 %v1897, 0.0
        %v2188 = vmax.f32 %v2123, 0.0
        %v2189 = vld [vmem:[%s9] sm:$0xff]
        %v2190 = vld [vmem:[%s9 + $0x8] sm:$0xff]
        %v2191 = vld [vmem:[%s9 + $0x10] sm:$0x1]
        %v2192 = vld [vmem:[%s9 + $0x18] sm:$0x1]
        %v2193 = vld [vmem:[%s10] sm:$0xff]
        %v2194 = vld [vmem:[%s10 + $0x8] sm:$0x1]
        %2196 = vset.pattern.permute.xlu0 0
        %2197 = vperm.xlu0 %2196, %v2193
        %v2198 = vpop.permute.xlu0 %2197
        %2201 = vset.pattern.permute.xlu0 0
        %2202 = vperm.xlu0 %2201, %v2194
        %v2203 = vpop.permute.xlu0 %2202
        %2205 = vmatpush.xpose.msra.mxu0 %v2155
        %2206 = vmatpush.xpose.msra.mxu0 %v2153
        %2207 = vmatpush.xpose.msra.mxu0 %v2151
        %2208 = vmatpush.xpose.msra.mxu0 %v2149
        %2209 = vmatpush.xpose.msra.mxu0 %v2147
        %2210 = vmatpush.xpose.msra.mxu0 %v2145
        %2211 = vmatpush.xpose.msra.mxu0 %v2143
        %2212 = vmatpush.xpose.msra.mxu0 %v2141
        %2213 = vmatpush.xpose.msra.mxu0 %v2139
        %2214 = vmatpush.xpose.msra.mxu0 %v2137
        %2215 = vmatpush.xpose.msra.mxu0 %v2135
        %2216 = vmatpush.xpose.msra.mxu0 %v2133
        %2217 = vmatpush.xpose.msra.mxu0 %v2131
        %2218 = vmatpush.xpose.msra.mxu0 %v2129
        %2219 = vmatpush.xpose.msra.mxu0 %v2127
        %2220 = vmatpush.xpose.msra.mxu0 %v2125
        %2221 = vmatmul.f32.gmra.mxu0 %v2189
        %v2222 = vpop.f32.mrf.mxu0
        %v2223 = vadd.f32 %v2198, %v2222
        %2224 = vmatmul.f32.gmra.mxu0 %v2191
        %v2225 = vpop.f32.mrf.mxu0
        %v2226 = vadd.f32 %v2203, %v2225
        %2227 = vdwg.mxu0
        %2228 = vmatpush.xpose.msra.mxu0 %v2156
        %2229 = vmatpush.xpose.msra.mxu0 %v2154
        %2230 = vmatpush.xpose.msra.mxu0 %v2152
        %2231 = vmatpush.xpose.msra.mxu0 %v2150
        %2232 = vmatpush.xpose.msra.mxu0 %v2148
        %2233 = vmatpush.xpose.msra.mxu0 %v2146
        %2234 = vmatpush.xpose.msra.mxu0 %v2144
        %2235 = vmatpush.xpose.msra.mxu0 %v2142
        %2236 = vmatpush.xpose.msra.mxu0 %v2140
        %2237 = vmatpush.xpose.msra.mxu0 %v2138
        %2238 = vmatpush.xpose.msra.mxu0 %v2136
        %2239 = vmatpush.xpose.msra.mxu0 %v2134
        %2240 = vmatpush.xpose.msra.mxu0 %v2132
        %2241 = vmatpush.xpose.msra.mxu0 %v2130
        %2242 = vmatpush.xpose.msra.mxu0 %v2128
        %2243 = vmatpush.xpose.msra.mxu0 %v2126
        %2244 = vmatmul.f32.gmra.mxu0 %v2190
        %v2245 = vpop.f32.mrf.mxu0
        %v2246 = vadd.f32 %v2223, %v2245
        %2247 = vmatmul.f32.gmra.mxu0 %v2192
        %v2248 = vpop.f32.mrf.mxu0
        %v2249 = vadd.f32 %v2226, %v2248
        %2250 = vdwg.mxu0
        %2251 = vmatpush.xpose.msra.mxu0 %v2187
        %2252 = vmatpush.xpose.msra.mxu0 %v2185
        %2253 = vmatpush.xpose.msra.mxu0 %v2183
        %2254 = vmatpush.xpose.msra.mxu0 %v2181
        %2255 = vmatpush.xpose.msra.mxu0 %v2179
        %2256 = vmatpush.xpose.msra.mxu0 %v2177
        %2257 = vmatpush.xpose.msra.mxu0 %v2175
        %2258 = vmatpush.xpose.msra.mxu0 %v2173
        %2259 = vmatpush.xpose.msra.mxu0 %v2171
        %2260 = vmatpush.xpose.msra.mxu0 %v2169
        %2261 = vmatpush.xpose.msra.mxu0 %v2167
        %2262 = vmatpush.xpose.msra.mxu0 %v2165
        %2263 = vmatpush.xpose.msra.mxu0 %v2163
        %2264 = vmatpush.xpose.msra.mxu0 %v2161
        %2265 = vmatpush.xpose.msra.mxu0 %v2159
        %2266 = vmatpush.xpose.msra.mxu0 %v2157
        %2267 = vmatmul.f32.gmra.mxu0 %v2189
        %v2268 = vpop.f32.mrf.mxu0
        %v2269 = vadd.f32 %v2198, %v2268
        %2270 = vmatmul.f32.gmra.mxu0 %v2191
        %v2271 = vpop.f32.mrf.mxu0
        %v2272 = vadd.f32 %v2203, %v2271
        %2273 = vdwg.mxu0
        %2274 = vmatpush.xpose.msra.mxu0 %v2188
        %2275 = vmatpush.xpose.msra.mxu0 %v2186
        %2276 = vmatpush.xpose.msra.mxu0 %v2184
        %2277 = vmatpush.xpose.msra.mxu0 %v2182
        %2278 = vmatpush.xpose.msra.mxu0 %v2180
        %2279 = vmatpush.xpose.msra.mxu0 %v2178
        %2280 = vmatpush.xpose.msra.mxu0 %v2176
        %2281 = vmatpush.xpose.msra.mxu0 %v2174
        %2282 = vmatpush.xpose.msra.mxu0 %v2172
        %2283 = vmatpush.xpose.msra.mxu0 %v2170
        %2284 = vmatpush.xpose.msra.mxu0 %v2168
        %2285 = vmatpush.xpose.msra.mxu0 %v2166
        %2286 = vmatpush.xpose.msra.mxu0 %v2164
        %2287 = vmatpush.xpose.msra.mxu0 %v2162
        %2288 = vmatpush.xpose.msra.mxu0 %v2160
        %2289 = vmatpush.xpose.msra.mxu0 %v2158
        %2290 = vmatmul.f32.gmra.mxu0 %v2190
        %v2291 = vpop.f32.mrf.mxu0
        %v2292 = vadd.f32 %v2269, %v2291
        %2293 = vmatmul.f32.gmra.mxu0 %v2192
        %v2294 = vpop.f32.mrf.mxu0
        %v2295 = vadd.f32 %v2272, %v2294
        %2296 = vdwg.mxu0
        %2297 = vst [vmem:[%s397] sm:$0xff] %v2246
        %2298 = vst [vmem:[%s397 + $0x8] sm:$0xff] %v2292
        %2299 = vst [vmem:[%s397 + $0x10] sm:$0x1] %v2249
        %2300 = vst [vmem:[%s397 + $0x18] sm:$0x1] %v2295
        %s2301 = sand.u32 %s270, 1
        %s2302 = scalar_lea.sflag [#allocation4], %s2301
        %s2303 = sand.u32 %s270, 1
        %s2304 = smul.addr %s2303, 32
        %s2305 = scalar_lea.vmem [#allocation5], %s2304
        // Predicated region
        $region69: #{tpu_custom_call.1} parent=63 // pred_check
          %p2306 = pneg %p280
        $region70: #{tpu_custom_call.1} parent=63 // pred_check_branch
          %2308 = sbr.rel (%p2306) target = $region72
        $region71: #{tpu_custom_call.1} parent=63 // pred_region
          %s2309 = smul.u32 2, %s26
          %2311 = vsyncadd %s2302, 0
          %s2312 = smul.addr %s2309, 8
          %s2313 = scalar_lea.hbm %s11, %s2312
          %s2314 = sshll.u32 %s2305, 4
          %s2315 = int_to_ptr.vmem [resolvable:$true] %s2314
          %s2316 = sshll.u32 %s2313, 4
          %s2317 = int_to_ptr.hbm [resolvable:$true] %s2316
          %2322 = dma.vmem_to_hbm [thread:$0]  %s2315, 512, %s2317, %s2302, 256, 768, 16
        $region72: #{tpu_custom_call.1} parent=63 // pred_fallthru
          _
      $region64: #{tpu_custom_call.1} parent=5 // pred_fallthru
        _
      %p2323 = scmp.le.s32.totalorder 2, %s21
      // Predicated region
      $region73: #{tpu_custom_call.1} parent=5 // pred_check
        %p2324 = pneg %p2323
      $region74: #{tpu_custom_call.1} parent=5 // pred_check_branch
        %2326 = sbr.rel (%p2324) target = $region76
      $region75: #{tpu_custom_call.1} parent=5 // pred_region
        %s2327 = ssub.s32 %s21, 2
        // Predicated region
        $region77: #{tpu_custom_call.1} parent=75 // pred_check
          %p2328 = pneg %p286
        $region78: #{tpu_custom_call.1} parent=75 // pred_check_branch
          %2330 = sbr.rel (%p2328) target = $region80
        $region79: #{tpu_custom_call.1} parent=75 // pred_region
          %s2331 = sand.u32 %s271, 1
          %s2332 = scalar_lea.sflag [#allocation4], %s2331
          %s2333 = sand.u32 %s271, 1
          %s2334 = smul.addr %s2333, 32
          %s2335 = scalar_lea.vmem [#allocation5], %s2334
          %2337 = dma.done %s2332, 512
        $region80: #{tpu_custom_call.1} parent=75 // pred_fallthru
          _
      $region76: #{tpu_custom_call.1} parent=5 // pred_fallthru
        _
    $region6: #{tpu_custom_call.1} parent=1 // loop_footer
      %s25 = sadd.s32 1, %s21
    $region7: #{tpu_custom_call.1} parent=1 // loop_footer_branch
      %20 = sbr.rel target = $region3
    $region8: #{tpu_custom_call.1} parent=1 // loop_exit
      _
    %2338 = vsyncpa [#allocation3], 1
    %s2339 = scalar_lea.sflag [#allocation3], 1
    %2340 = vsyncpa %s2339, 1
    %2341 = vsyncpa [#allocation4], 1
    %s2342 = scalar_lea.sflag [#allocation4], 1
    %2343 = vsyncpa %s2342, 1

</llo_original>
